<compile_context>
chip_gen: v7x
topology: tpu7x:2x2x1
jax: 0.10.0
libtpu: 0.0.40
codegen_flags: <defaults>
</compile_context>

<pallas_src>
import functools

import jax
import jax.numpy as jnp
from jax.experimental import pallas as pl
from jax.experimental.pallas import tpu as pltpu

BN_EPS = 1e-5
HIDDEN = 256
POS_ENC_DIM = 128
NUM_CLASSES = 8
NUM_DOMAINS = 2
HEAD_PAD = 128   # lane-dense packed width for the three classifier heads
LANE = 128
SUBLANE = 8


def _round_up(n, m):
    return ((n + m - 1) // m) * m


# ---------------------------------------------------------------------------
# Fused whole-forward Pallas kernel (one batch tile per grid step)
# ---------------------------------------------------------------------------
def _forward_kernel(x_ref, coord_ref,
                    pw1_ref, pb1_ref, pwo_ref, pbo_ref,
                    w1x_ref, w1p_ref, b1_ref,
                    iw2_ref, ib2_ref, iw3_ref, ib3_ref,
                    sw2_ref, sb2_ref, sw3_ref, sb3_ref,
                    whi_ref, whs_ref, bh_ref,
                    emb_ref, n1_ref, fc_ref, heads_ref,
                    *, hidden_dim, coord_dim):
    f32 = jnp.float32
    bf16 = jnp.bfloat16

    # --- pos_enc layer 1: K == coord_dim (2) -> broadcast FMAs on the VPU,
    #     not a degenerate MXU contraction. BN folded, Dropout = identity.
    coord = coord_ref[...]                         # (TB, coord_dim) f32
    pw1 = pw1_ref[...]                             # (coord_dim, 256) f32
    acc = coord[:, 0:1] * pw1[0:1, :]
    for j in range(1, coord_dim):
        acc = acc + coord[:, j:j + 1] * pw1[j:j + 1, :]
    h = jnp.maximum(acc + pb1_ref[...], 0.0)       # (TB, 256)

    # --- pos_enc output layer + sigmoid (exp on EUP, approx reciprocal on EUP)
    z = jnp.dot(h.astype(bf16), pwo_ref[...],
                preferred_element_type=f32) + pbo_ref[...]
    pos = pl.reciprocal(1.0 + jnp.exp(-z), approx=True)   # (TB, 128)

    # --- merged inv/spec layer 1; concat(x, pos) eliminated via row-split W ---
    h12 = (jnp.dot(x_ref[...].astype(bf16), w1x_ref[...], preferred_element_type=f32)
           + jnp.dot(pos.astype(bf16), w1p_ref[...], preferred_element_type=f32)
           + b1_ref[...])
    h12 = jnp.maximum(h12, 0.0)                    # (TB, 512) = [inv_emb | spec_emb]
    emb_ref[...] = h12                             # coalesced lane-dense store

    inv_emb = h12[:, :hidden_dim].astype(bf16)
    spec_emb = h12[:, hidden_dim:].astype(bf16)

    # --- layer 2 (inv & spec), coalesced (TB, 512) output --------------------
    inv_n1 = jnp.maximum(
        jnp.dot(inv_emb, iw2_ref[...], preferred_element_type=f32) + ib2_ref[...], 0.0)
    spec_n1 = jnp.maximum(
        jnp.dot(spec_emb, sw2_ref[...], preferred_element_type=f32) + sb2_ref[...], 0.0)
    n1_ref[:, :hidden_dim] = inv_n1
    n1_ref[:, hidden_dim:] = spec_n1

    # --- layer 3 (inv & spec), coalesced (TB, 512) output --------------------
    inv_fc = jnp.maximum(
        jnp.dot(inv_n1.astype(bf16), iw3_ref[...], preferred_element_type=f32)
        + ib3_ref[...], 0.0)
    spec_fc = jnp.maximum(
        jnp.dot(spec_n1.astype(bf16), sw3_ref[...], preferred_element_type=f32)
        + sb3_ref[...], 0.0)
    fc_ref[:, :hidden_dim] = inv_fc
    fc_ref[:, hidden_dim:] = spec_fc

    # --- packed heads (clf_task / clf_dom / discr) in ONE lane-dense block ---
    # grad_reverse(inv_fc) is identity in the forward pass.
    heads_ref[...] = (
        jnp.dot(inv_fc.astype(bf16), whi_ref[...], preferred_element_type=f32)
        + jnp.dot(spec_fc.astype(bf16), whs_ref[...], preferred_element_type=f32)
        + bh_ref[...])


def mlp_disentangle_pos_dann_forward(packed_params, x, coord, *, tile_b=256):
    B, x_dim = x.shape
    coord_dim = coord.shape[1]
    X_PAD = packed_params[4].shape[0]    # padded x width baked into w1x rows

    # batch tile: multiple of 8 sublanes, capped at (sublane-rounded) B
    tile_b = max(SUBLANE, min(_round_up(tile_b, SUBLANE), _round_up(B, SUBLANE)))
    Bp = _round_up(B, tile_b)
    nb = Bp // tile_b

    # lane-dense, batch-padded inputs (zeros in padding are harmless; sliced off)
    x_p = jnp.zeros((Bp, X_PAD), jnp.float32).at[:B, :x_dim].set(x.astype(jnp.float32))
    coord_p = jnp.zeros((Bp, coord_dim), jnp.float32).at[:B, :].set(coord.astype(jnp.float32))

    vmem = pltpu.MemorySpace.VMEM
    row_spec = lambda d: pl.BlockSpec((tile_b, d), lambda i: (i, 0), memory_space=vmem)
    w_spec = lambda p: pl.BlockSpec(p.shape, lambda i: (0, 0), memory_space=vmem)

    in_specs = [row_spec(X_PAD), row_spec(coord_dim)] + [w_spec(p) for p in packed_params]
    out_specs = (row_spec(2 * HIDDEN), row_spec(2 * HIDDEN), row_spec(2 * HIDDEN),
                 row_spec(HEAD_PAD))
    out_shapes = (
        jax.ShapeDtypeStruct((Bp, 2 * HIDDEN), jnp.float32),   # [inv_emb | spec_emb]
        jax.ShapeDtypeStruct((Bp, 2 * HIDDEN), jnp.float32),   # [inv_n1  | spec_n1 ]
        jax.ShapeDtypeStruct((Bp, 2 * HIDDEN), jnp.float32),   # [inv_fc  | spec_fc ]
        jax.ShapeDtypeStruct((Bp, HEAD_PAD), jnp.float32),     # packed heads
    )

    flops_row = 2 * (coord_dim * HIDDEN                      # pos layer 1
                     + HIDDEN * POS_ENC_DIM                  # pos out
                     + (X_PAD + POS_ENC_DIM) * 2 * HIDDEN    # merged layer 1
                     + 2 * HIDDEN * HIDDEN                   # inv/spec layer 2
                     + 2 * HIDDEN * HIDDEN                   # inv/spec layer 3
                     + 2 * HIDDEN * HEAD_PAD)                # packed heads
    weight_bytes = sum(int(p.size) * p.dtype.itemsize for p in packed_params)
    io_bytes = Bp * (X_PAD + coord_dim + 3 * 2 * HIDDEN + HEAD_PAD) * 4
    cost = pl.CostEstimate(flops=flops_row * Bp,
                           transcendentals=POS_ENC_DIM * Bp,
                           bytes_accessed=weight_bytes + io_bytes)

    kernel = functools.partial(_forward_kernel, hidden_dim=HIDDEN, coord_dim=coord_dim)
    emb, n1, fc, heads = pl.pallas_call(
        kernel,
        out_shape=out_shapes,
        grid=(nb,),
        in_specs=in_specs,
        out_specs=out_specs,
        compiler_params=pltpu.CompilerParams(dimension_semantics=("parallel",)),
        cost_estimate=cost,
    )(x_p, coord_p, *packed_params)

    inv_emb, spec_emb = emb[:B, :HIDDEN], emb[:B, HIDDEN:]
    inv_n1, spec_n1 = n1[:B, :HIDDEN], n1[:B, HIDDEN:]
    inv_fc, spec_fc = fc[:B, :HIDDEN], fc[:B, HIDDEN:]
    classif = heads[:B, :NUM_CLASSES]
    classif_spec = heads[:B, NUM_CLASSES:NUM_CLASSES + NUM_DOMAINS]
    classif_discr = heads[:B, NUM_CLASSES + NUM_DOMAINS:NUM_CLASSES + 2 * NUM_DOMAINS]
    return (classif, inv_emb, spec_emb, classif_spec, inv_n1, spec_n1,
            inv_fc, spec_fc, classif_discr)


# ---------------------------------------------------------------------------
# Parameter construction (PyTorch-style init, BN folded at build time)
# ---------------------------------------------------------------------------
def _init_linear(key, din, dout):
    kw, kb = jax.random.split(key)
    bound = 1.0 / (din ** 0.5)
    w = jax.random.uniform(kw, (din, dout), jnp.float32, -bound, bound)
    b = jax.random.uniform(kb, (1, dout), jnp.float32, -bound, bound)
    return w, b


def _fold_bn(w, b):
    # Fresh BatchNorm1d in eval mode after Linear: y = (xW + b) / sqrt(1 + eps)
    # TODO(synk): training-mode BatchNorm (batch statistics) and nontrivial
    # running stats / affine params are not modeled; inference-mode fresh-BN only.
    s = 1.0 / (1.0 + BN_EPS) ** 0.5
    return w * s, b * s


def build_raw_params(key, x_dim, coord_dim):
    keys = jax.random.split(key, 11)
    xcat = x_dim + POS_ENC_DIM
    p = {}
    p["pos_l1"] = _fold_bn(*_init_linear(keys[0], coord_dim, HIDDEN))
    p["pos_out"] = _init_linear(keys[1], HIDDEN, POS_ENC_DIM)
    p["inv_l1"] = _fold_bn(*_init_linear(keys[2], xcat, HIDDEN))
    p["inv_l2"] = _fold_bn(*_init_linear(keys[3], HIDDEN, HIDDEN))
    p["inv_l3"] = _fold_bn(*_init_linear(keys[4], HIDDEN, HIDDEN))
    p["spec_l1"] = _fold_bn(*_init_linear(keys[5], xcat, HIDDEN))
    p["spec_l2"] = _fold_bn(*_init_linear(keys[6], HIDDEN, HIDDEN))
    p["spec_l3"] = _fold_bn(*_init_linear(keys[7], HIDDEN, HIDDEN))
    p["clf_task"] = _init_linear(keys[8], HIDDEN, NUM_CLASSES)
    p["clf_dom"] = _init_linear(keys[9], HIDDEN, NUM_DOMAINS)
    p["discr"] = _init_linear(keys[10], HIDDEN, NUM_DOMAINS)
    return p


def pack_params(raw, x_dim):
    """Merge inv_l1/spec_l1, split layer-1 rows by [x | pos_enc] (x rows padded
    to 128 lanes), pack heads lane-dense, and cast matmul weights to bf16."""
    bf16 = jnp.bfloat16
    x_pad = _round_up(x_dim, LANE)

    # merged layer-1 of both encoders: [x_dim + 128, 2*HIDDEN]
    w1 = jnp.concatenate([raw["inv_l1"][0], raw["spec_l1"][0]], axis=1)
    b1 = jnp.concatenate([raw["inv_l1"][1], raw["spec_l1"][1]], axis=1)
    w1x = jnp.zeros((x_pad, 2 * HIDDEN), jnp.float32).at[:x_dim, :].set(w1[:x_dim, :])
    w1p = w1[x_dim:, :]

    # packed lane-dense heads: cols [0:8]=clf_task, [8:10]=clf_dom, [10:12]=discr
    c0, c1, c2 = NUM_CLASSES, NUM_CLASSES + NUM_DOMAINS, NUM_CLASSES + 2 * NUM_DOMAINS
    whi = jnp.zeros((HIDDEN, HEAD_PAD), jnp.float32)
    whi = whi.at[:, :c0].set(raw["clf_task"][0])
    whi = whi.at[:, c1:c2].set(raw["discr"][0])
    whs = jnp.zeros((HIDDEN, HEAD_PAD), jnp.float32)
    whs = whs.at[:, c0:c1].set(raw["clf_dom"][0])
    bh = jnp.zeros((1, HEAD_PAD), jnp.float32)
    bh = bh.at[:, :c0].set(raw["clf_task"][1])
    bh = bh.at[:, c0:c1].set(raw["clf_dom"][1])
    bh = bh.at[:, c1:c2].set(raw["discr"][1])

    return (raw["pos_l1"][0], raw["pos_l1"][1],               # f32 (VPU FMA path)
            raw["pos_out"][0].astype(bf16), raw["pos_out"][1],
            w1x.astype(bf16), w1p.astype(bf16), b1,
            raw["inv_l2"][0].astype(bf16), raw["inv_l2"][1],
            raw["inv_l3"][0].astype(bf16), raw["inv_l3"][1],
            raw["spec_l2"][0].astype(bf16), raw["spec_l2"][1],
            raw["spec_l3"][0].astype(bf16), raw["spec_l3"][1],
            whi.astype(bf16), whs.astype(bf16), bh)


# ---------------------------------------------------------------------------
# Pure-JAX reference (per-layer, un-merged) using the SAME precision policy
# (bf16 matmul operands, f32 accumulation) for correctness checking.
# ---------------------------------------------------------------------------
def reference_forward(raw, x, coord):
    f32, bf16 = jnp.float32, jnp.bfloat16

    def act(y, a):
        if a == "relu":
            return jnp.maximum(y, 0.0)
        if a == "sigmoid":
            return 1.0 / (1.0 + jnp.exp(-y))
        return y

    def lin_f32(h, wb, a=None):
        w, b = wb
        return act(h @ w + b, a)

    def lin_mxu(h, wb, a=None):
        w, b = wb
        y = jnp.dot(h.astype(bf16), w.astype(bf16), preferred_element_type=f32) + b
        return act(y, a)

    h = lin_f32(coord, raw["pos_l1"], "relu")
    pos = lin_mxu(h, raw["pos_out"], "sigmoid")
    xc = jnp.concatenate([x, pos], axis=1)
    inv_emb = lin_mxu(xc, raw["inv_l1"], "relu")
    inv_n1 = lin_mxu(inv_emb, raw["inv_l2"], "relu")
    inv_fc = lin_mxu(inv_n1, raw["inv_l3"], "relu")
    classif = lin_mxu(inv_fc, raw["clf_task"])
    spec_emb = lin_mxu(xc, raw["spec_l1"], "relu")
    spec_n1 = lin_mxu(spec_emb, raw["spec_l2"], "relu")
    spec_fc = lin_mxu(spec_n1, raw["spec_l3"], "relu")
    classif_spec = lin_mxu(spec_fc, raw["clf_dom"])
    classif_discr = lin_mxu(inv_fc, raw["discr"])
    return (classif, inv_emb, spec_emb, classif_spec, inv_n1, spec_n1,
            inv_fc, spec_fc, classif_discr)


if __name__ == "__main__":
    key = jax.random.PRNGKey(0)
    k_param, k_x, k_coord = jax.random.split(key, 3)

    B, X_DIM, COORD_DIM = 8, 16, 2
    x = jax.random.normal(k_x, (B, X_DIM), jnp.float32)
    coord = jax.random.normal(k_coord, (B, COORD_DIM), jnp.float32)

    raw = build_raw_params(k_param, X_DIM, COORD_DIM)
    packed = pack_params(raw, X_DIM)

    fwd = jax.jit(lambda p, a, c: mlp_disentangle_pos_dann_forward(p, a, c, tile_b=256))
    outs = jax.block_until_ready(fwd(packed, x, coord))

    refs = reference_forward(raw, x, coord)
    names = ["classif", "inv_emb", "spec_emb", "classif_spec", "inv_emb_n1",
             "spec_emb_n1", "inv_fc_feat", "spec_fc_feat", "classif_discr"]
    for name, o, r in zip(names, outs, refs):
        assert o.shape == r.shape, f"{name}: shape {o.shape} vs {r.shape}"
        assert jnp.allclose(o, r, atol=3e-2, rtol=3e-2), f"{name}: mismatch vs reference"

    # TODO(synk): training-mode BatchNorm (batch statistics) and Dropout are not
    # modeled; this kernel implements inference-mode semantics only.
    print("KERNEL_OK")
</pallas_src>

<mosaic_0001>
module attributes {stable_mosaic.version = 11 : i64} {
  func.func @_forward_kernel(%arg0: i32, %arg1: memref<8x128xf32, #tpu.memory_space<vmem>>, %arg2: memref<8x2xf32, #tpu.memory_space<vmem>>, %arg3: memref<2x256xf32, #tpu.memory_space<vmem>>, %arg4: memref<1x256xf32, #tpu.memory_space<vmem>>, %arg5: memref<256x128xbf16, #tpu.memory_space<vmem>>, %arg6: memref<1x128xf32, #tpu.memory_space<vmem>>, %arg7: memref<128x512xbf16, #tpu.memory_space<vmem>>, %arg8: memref<128x512xbf16, #tpu.memory_space<vmem>>, %arg9: memref<1x512xf32, #tpu.memory_space<vmem>>, %arg10: memref<256x256xbf16, #tpu.memory_space<vmem>>, %arg11: memref<1x256xf32, #tpu.memory_space<vmem>>, %arg12: memref<256x256xbf16, #tpu.memory_space<vmem>>, %arg13: memref<1x256xf32, #tpu.memory_space<vmem>>, %arg14: memref<256x256xbf16, #tpu.memory_space<vmem>>, %arg15: memref<1x256xf32, #tpu.memory_space<vmem>>, %arg16: memref<256x256xbf16, #tpu.memory_space<vmem>>, %arg17: memref<1x256xf32, #tpu.memory_space<vmem>>, %arg18: memref<256x128xbf16, #tpu.memory_space<vmem>>, %arg19: memref<256x128xbf16, #tpu.memory_space<vmem>>, %arg20: memref<1x128xf32, #tpu.memory_space<vmem>>, %arg21: memref<8x512xf32, #tpu.memory_space<vmem>>, %arg22: memref<8x512xf32, #tpu.memory_space<vmem>>, %arg23: memref<8x512xf32, #tpu.memory_space<vmem>>, %arg24: memref<8x128xf32, #tpu.memory_space<vmem>>) attributes {dimension_semantics = [#tpu.dimension_semantics<parallel>], iteration_bounds = array<i64: 1>, scalar_prefetch = 0 : i64, scratch_operands = 0 : i64, tpu.core_type = #tpu.core_type<tc>, window_params = [{transform_indices = @transform_0, window_bounds = array<i64: 8, 128>}, {transform_indices = @transform_1, window_bounds = array<i64: 8, 2>}, {pipeline_mode = #tpu.pipeline_mode<synchronous>, transform_indices = @transform_2, window_bounds = array<i64: 2, 256>}, {pipeline_mode = #tpu.pipeline_mode<synchronous>, transform_indices = @transform_3, window_bounds = array<i64: 1, 256>}, {pipeline_mode = #tpu.pipeline_mode<synchronous>, transform_indices = @transform_4, window_bounds = array<i64: 256, 128>}, {pipeline_mode = #tpu.pipeline_mode<synchronous>, transform_indices = @transform_5, window_bounds = array<i64: 1, 128>}, {pipeline_mode = #tpu.pipeline_mode<synchronous>, transform_indices = @transform_6, window_bounds = array<i64: 128, 512>}, {pipeline_mode = #tpu.pipeline_mode<synchronous>, transform_indices = @transform_7, window_bounds = array<i64: 128, 512>}, {pipeline_mode = #tpu.pipeline_mode<synchronous>, transform_indices = @transform_8, window_bounds = array<i64: 1, 512>}, {pipeline_mode = #tpu.pipeline_mode<synchronous>, transform_indices = @transform_9, window_bounds = array<i64: 256, 256>}, {pipeline_mode = #tpu.pipeline_mode<synchronous>, transform_indices = @transform_10, window_bounds = array<i64: 1, 256>}, {pipeline_mode = #tpu.pipeline_mode<synchronous>, transform_indices = @transform_11, window_bounds = array<i64: 256, 256>}, {pipeline_mode = #tpu.pipeline_mode<synchronous>, transform_indices = @transform_12, window_bounds = array<i64: 1, 256>}, {pipeline_mode = #tpu.pipeline_mode<synchronous>, transform_indices = @transform_13, window_bounds = array<i64: 256, 256>}, {pipeline_mode = #tpu.pipeline_mode<synchronous>, transform_indices = @transform_14, window_bounds = array<i64: 1, 256>}, {pipeline_mode = #tpu.pipeline_mode<synchronous>, transform_indices = @transform_15, window_bounds = array<i64: 256, 256>}, {pipeline_mode = #tpu.pipeline_mode<synchronous>, transform_indices = @transform_16, window_bounds = array<i64: 1, 256>}, {pipeline_mode = #tpu.pipeline_mode<synchronous>, transform_indices = @transform_17, window_bounds = array<i64: 256, 128>}, {pipeline_mode = #tpu.pipeline_mode<synchronous>, transform_indices = @transform_18, window_bounds = array<i64: 256, 128>}, {pipeline_mode = #tpu.pipeline_mode<synchronous>, transform_indices = @transform_19, window_bounds = array<i64: 1, 128>}, {transform_indices = @transform_20, window_bounds = array<i64: 8, 512>}, {transform_indices = @transform_21, window_bounds = array<i64: 8, 512>}, {transform_indices = @transform_22, window_bounds = array<i64: 8, 512>}, {transform_indices = @transform_23, window_bounds = array<i64: 8, 128>}]} {
    %c0 = arith.constant 0 : index
    %c0_0 = arith.constant 0 : index
    %0 = vector.load %arg2[%c0, %c0_0] : memref<8x2xf32, #tpu.memory_space<vmem>>, vector<8x2xf32>
    %c0_1 = arith.constant 0 : index
    %c0_2 = arith.constant 0 : index
    %1 = vector.load %arg3[%c0_1, %c0_2] : memref<2x256xf32, #tpu.memory_space<vmem>>, vector<2x256xf32>
    %2 = vector.extract_strided_slice %0 {offsets = [0, 0], sizes = [8, 1], strides = [1, 1]} : vector<8x2xf32> to vector<8x1xf32>
    %3 = vector.extract_strided_slice %1 {offsets = [0, 0], sizes = [1, 256], strides = [1, 1]} : vector<2x256xf32> to vector<1x256xf32>
    %4 = vector.broadcast %2 : vector<8x1xf32> to vector<8x256xf32>
    %5 = vector.broadcast %3 : vector<1x256xf32> to vector<8x256xf32>
    %6 = arith.mulf %4, %5 : vector<8x256xf32>
    %7 = vector.extract_strided_slice %0 {offsets = [0, 1], sizes = [8, 1], strides = [1, 1]} : vector<8x2xf32> to vector<8x1xf32>
    %8 = vector.extract_strided_slice %1 {offsets = [1, 0], sizes = [1, 256], strides = [1, 1]} : vector<2x256xf32> to vector<1x256xf32>
    %9 = vector.broadcast %7 : vector<8x1xf32> to vector<8x256xf32>
    %10 = vector.broadcast %8 : vector<1x256xf32> to vector<8x256xf32>
    %11 = arith.mulf %9, %10 : vector<8x256xf32>
    %12 = arith.addf %6, %11 : vector<8x256xf32>
    %c0_3 = arith.constant 0 : index
    %c0_4 = arith.constant 0 : index
    %13 = vector.load %arg4[%c0_3, %c0_4] : memref<1x256xf32, #tpu.memory_space<vmem>>, vector<1x256xf32>
    %14 = vector.broadcast %13 : vector<1x256xf32> to vector<8x256xf32>
    %15 = arith.addf %12, %14 : vector<8x256xf32>
    %cst = arith.constant 0.000000e+00 : f32
    %16 = vector.broadcast %cst : f32 to vector<8x256xf32>
    %17 = arith.maximumf %15, %16 : vector<8x256xf32>
    %18 = arith.truncf %17 : vector<8x256xf32> to vector<8x256xbf16>
    %c0_5 = arith.constant 0 : index
    %c0_6 = arith.constant 0 : index
    %19 = vector.load %arg5[%c0_5, %c0_6] : memref<256x128xbf16, #tpu.memory_space<vmem>>, vector<256x128xbf16>
    %cst_7 = arith.constant dense<0.000000e+00> : vector<8x128xf32>
    %20 = tpu.matmul %18, %19, %cst_7 {dimension_numbers = #tpu.dot_dimension_numbers<[1], [0], [0], [1], [0, 0, 1, 1], [], []>} : vector<8x256xbf16>, vector<256x128xbf16>, vector<8x128xf32> -> vector<8x128xf32>
    %c0_8 = arith.constant 0 : index
    %c0_9 = arith.constant 0 : index
    %21 = vector.load %arg6[%c0_8, %c0_9] : memref<1x128xf32, #tpu.memory_space<vmem>>, vector<1x128xf32>
    %22 = vector.broadcast %21 : vector<1x128xf32> to vector<8x128xf32>
    %23 = arith.addf %20, %22 : vector<8x128xf32>
    %cst_10 = arith.constant 0.000000e+00 : f32
    %24 = vector.broadcast %cst_10 : f32 to vector<8x128xf32>
    %25 = arith.subf %24, %23 : vector<8x128xf32>
    %26 = math.exp %25 : vector<8x128xf32>
    %cst_11 = arith.constant 1.000000e+00 : f32
    %27 = vector.broadcast %cst_11 : f32 to vector<8x128xf32>
    %28 = arith.addf %27, %26 : vector<8x128xf32>
    %29 = tpu.reciprocal %28 {approx = true} : vector<8x128xf32> -> vector<8x128xf32>
    %c0_12 = arith.constant 0 : index
    %c0_13 = arith.constant 0 : index
    %30 = vector.load %arg1[%c0_12, %c0_13] : memref<8x128xf32, #tpu.memory_space<vmem>>, vector<8x128xf32>
    %31 = arith.truncf %30 : vector<8x128xf32> to vector<8x128xbf16>
    %c0_14 = arith.constant 0 : index
    %c0_15 = arith.constant 0 : index
    %32 = vector.load %arg7[%c0_14, %c0_15] : memref<128x512xbf16, #tpu.memory_space<vmem>>, vector<128x512xbf16>
    %cst_16 = arith.constant dense<0.000000e+00> : vector<8x512xf32>
    %33 = tpu.matmul %31, %32, %cst_16 {dimension_numbers = #tpu.dot_dimension_numbers<[1], [0], [0], [1], [0, 0, 1, 1], [], []>} : vector<8x128xbf16>, vector<128x512xbf16>, vector<8x512xf32> -> vector<8x512xf32>
    %34 = arith.truncf %29 : vector<8x128xf32> to vector<8x128xbf16>
    %c0_17 = arith.constant 0 : index
    %c0_18 = arith.constant 0 : index
    %35 = vector.load %arg8[%c0_17, %c0_18] : memref<128x512xbf16, #tpu.memory_space<vmem>>, vector<128x512xbf16>
    %cst_19 = arith.constant dense<0.000000e+00> : vector<8x512xf32>
    %36 = tpu.matmul %34, %35, %cst_19 {dimension_numbers = #tpu.dot_dimension_numbers<[1], [0], [0], [1], [0, 0, 1, 1], [], []>} : vector<8x128xbf16>, vector<128x512xbf16>, vector<8x512xf32> -> vector<8x512xf32>
    %37 = arith.addf %33, %36 : vector<8x512xf32>
    %c0_20 = arith.constant 0 : index
    %c0_21 = arith.constant 0 : index
    %38 = vector.load %arg9[%c0_20, %c0_21] : memref<1x512xf32, #tpu.memory_space<vmem>>, vector<1x512xf32>
    %39 = vector.broadcast %38 : vector<1x512xf32> to vector<8x512xf32>
    %40 = arith.addf %37, %39 : vector<8x512xf32>
    %cst_22 = arith.constant 0.000000e+00 : f32
    %41 = vector.broadcast %cst_22 : f32 to vector<8x512xf32>
    %42 = arith.maximumf %40, %41 : vector<8x512xf32>
    %c0_23 = arith.constant 0 : index
    %c0_24 = arith.constant 0 : index
    %43 = vector.load %arg21[%c0_23, %c0_24] : memref<8x512xf32, #tpu.memory_space<vmem>>, vector<8x512xf32>
    tpu.vector_store %arg21[%c0_23, %c0_24], %42 {strides = array<i32>} : memref<8x512xf32, #tpu.memory_space<vmem>>, vector<8x512xf32>,
    %44 = vector.extract_strided_slice %42 {offsets = [0, 0], sizes = [8, 256], strides = [1, 1]} : vector<8x512xf32> to vector<8x256xf32>
    %45 = arith.truncf %44 : vector<8x256xf32> to vector<8x256xbf16>
    %46 = vector.extract_strided_slice %42 {offsets = [0, 256], sizes = [8, 256], strides = [1, 1]} : vector<8x512xf32> to vector<8x256xf32>
    %47 = arith.truncf %46 : vector<8x256xf32> to vector<8x256xbf16>
    %c0_25 = arith.constant 0 : index
    %c0_26 = arith.constant 0 : index
    %48 = vector.load %arg10[%c0_25, %c0_26] : memref<256x256xbf16, #tpu.memory_space<vmem>>, vector<256x256xbf16>
    %cst_27 = arith.constant dense<0.000000e+00> : vector<8x256xf32>
    %49 = tpu.matmul %45, %48, %cst_27 {dimension_numbers = #tpu.dot_dimension_numbers<[1], [0], [0], [1], [0, 0, 1, 1], [], []>} : vector<8x256xbf16>, vector<256x256xbf16>, vector<8x256xf32> -> vector<8x256xf32>
    %c0_28 = arith.constant 0 : index
    %c0_29 = arith.constant 0 : index
    %50 = vector.load %arg11[%c0_28, %c0_29] : memref<1x256xf32, #tpu.memory_space<vmem>>, vector<1x256xf32>
    %51 = vector.broadcast %50 : vector<1x256xf32> to vector<8x256xf32>
    %52 = arith.addf %49, %51 : vector<8x256xf32>
    %cst_30 = arith.constant 0.000000e+00 : f32
    %53 = vector.broadcast %cst_30 : f32 to vector<8x256xf32>
    %54 = arith.maximumf %52, %53 : vector<8x256xf32>
    %c0_31 = arith.constant 0 : index
    %c0_32 = arith.constant 0 : index
    %55 = vector.load %arg14[%c0_31, %c0_32] : memref<256x256xbf16, #tpu.memory_space<vmem>>, vector<256x256xbf16>
    %cst_33 = arith.constant dense<0.000000e+00> : vector<8x256xf32>
    %56 = tpu.matmul %47, %55, %cst_33 {dimension_numbers = #tpu.dot_dimension_numbers<[1], [0], [0], [1], [0, 0, 1, 1], [], []>} : vector<8x256xbf16>, vector<256x256xbf16>, vector<8x256xf32> -> vector<8x256xf32>
    %c0_34 = arith.constant 0 : index
    %c0_35 = arith.constant 0 : index
    %57 = vector.load %arg15[%c0_34, %c0_35] : memref<1x256xf32, #tpu.memory_space<vmem>>, vector<1x256xf32>
    %58 = vector.broadcast %57 : vector<1x256xf32> to vector<8x256xf32>
    %59 = arith.addf %56, %58 : vector<8x256xf32>
    %cst_36 = arith.constant 0.000000e+00 : f32
    %60 = vector.broadcast %cst_36 : f32 to vector<8x256xf32>
    %61 = arith.maximumf %59, %60 : vector<8x256xf32>
    %c0_37 = arith.constant 0 : index
    %c0_38 = arith.constant 0 : index
    %62 = vector.load %arg22[%c0_37, %c0_38] : memref<8x512xf32, #tpu.memory_space<vmem>>, vector<8x256xf32>
    tpu.vector_store %arg22[%c0_37, %c0_38], %54 {strides = array<i32>} : memref<8x512xf32, #tpu.memory_space<vmem>>, vector<8x256xf32>,
    %c0_39 = arith.constant 0 : index
    %c256 = arith.constant 256 : index
    %63 = vector.load %arg22[%c0_39, %c256] : memref<8x512xf32, #tpu.memory_space<vmem>>, vector<8x256xf32>
    tpu.vector_store %arg22[%c0_39, %c256], %61 {strides = array<i32>} : memref<8x512xf32, #tpu.memory_space<vmem>>, vector<8x256xf32>,
    %64 = arith.truncf %54 : vector<8x256xf32> to vector<8x256xbf16>
    %c0_40 = arith.constant 0 : index
    %c0_41 = arith.constant 0 : index
    %65 = vector.load %arg12[%c0_40, %c0_41] : memref<256x256xbf16, #tpu.memory_space<vmem>>, vector<256x256xbf16>
    %cst_42 = arith.constant dense<0.000000e+00> : vector<8x256xf32>
    %66 = tpu.matmul %64, %65, %cst_42 {dimension_numbers = #tpu.dot_dimension_numbers<[1], [0], [0], [1], [0, 0, 1, 1], [], []>} : vector<8x256xbf16>, vector<256x256xbf16>, vector<8x256xf32> -> vector<8x256xf32>
    %c0_43 = arith.constant 0 : index
    %c0_44 = arith.constant 0 : index
    %67 = vector.load %arg13[%c0_43, %c0_44] : memref<1x256xf32, #tpu.memory_space<vmem>>, vector<1x256xf32>
    %68 = vector.broadcast %67 : vector<1x256xf32> to vector<8x256xf32>
    %69 = arith.addf %66, %68 : vector<8x256xf32>
    %cst_45 = arith.constant 0.000000e+00 : f32
    %70 = vector.broadcast %cst_45 : f32 to vector<8x256xf32>
    %71 = arith.maximumf %69, %70 : vector<8x256xf32>
    %72 = arith.truncf %61 : vector<8x256xf32> to vector<8x256xbf16>
    %c0_46 = arith.constant 0 : index
    %c0_47 = arith.constant 0 : index
    %73 = vector.load %arg16[%c0_46, %c0_47] : memref<256x256xbf16, #tpu.memory_space<vmem>>, vector<256x256xbf16>
    %cst_48 = arith.constant dense<0.000000e+00> : vector<8x256xf32>
    %74 = tpu.matmul %72, %73, %cst_48 {dimension_numbers = #tpu.dot_dimension_numbers<[1], [0], [0], [1], [0, 0, 1, 1], [], []>} : vector<8x256xbf16>, vector<256x256xbf16>, vector<8x256xf32> -> vector<8x256xf32>
    %c0_49 = arith.constant 0 : index
    %c0_50 = arith.constant 0 : index
    %75 = vector.load %arg17[%c0_49, %c0_50] : memref<1x256xf32, #tpu.memory_space<vmem>>, vector<1x256xf32>
    %76 = vector.broadcast %75 : vector<1x256xf32> to vector<8x256xf32>
    %77 = arith.addf %74, %76 : vector<8x256xf32>
    %cst_51 = arith.constant 0.000000e+00 : f32
    %78 = vector.broadcast %cst_51 : f32 to vector<8x256xf32>
    %79 = arith.maximumf %77, %78 : vector<8x256xf32>
    %c0_52 = arith.constant 0 : index
    %c0_53 = arith.constant 0 : index
    %80 = vector.load %arg23[%c0_52, %c0_53] : memref<8x512xf32, #tpu.memory_space<vmem>>, vector<8x256xf32>
    tpu.vector_store %arg23[%c0_52, %c0_53], %71 {strides = array<i32>} : memref<8x512xf32, #tpu.memory_space<vmem>>, vector<8x256xf32>,
    %c0_54 = arith.constant 0 : index
    %c256_55 = arith.constant 256 : index
    %81 = vector.load %arg23[%c0_54, %c256_55] : memref<8x512xf32, #tpu.memory_space<vmem>>, vector<8x256xf32>
    tpu.vector_store %arg23[%c0_54, %c256_55], %79 {strides = array<i32>} : memref<8x512xf32, #tpu.memory_space<vmem>>, vector<8x256xf32>,
    %82 = arith.truncf %71 : vector<8x256xf32> to vector<8x256xbf16>
    %c0_56 = arith.constant 0 : index
    %c0_57 = arith.constant 0 : index
    %83 = vector.load %arg18[%c0_56, %c0_57] : memref<256x128xbf16, #tpu.memory_space<vmem>>, vector<256x128xbf16>
    %cst_58 = arith.constant dense<0.000000e+00> : vector<8x128xf32>
    %84 = tpu.matmul %82, %83, %cst_58 {dimension_numbers = #tpu.dot_dimension_numbers<[1], [0], [0], [1], [0, 0, 1, 1], [], []>} : vector<8x256xbf16>, vector<256x128xbf16>, vector<8x128xf32> -> vector<8x128xf32>
    %85 = arith.truncf %79 : vector<8x256xf32> to vector<8x256xbf16>
    %c0_59 = arith.constant 0 : index
    %c0_60 = arith.constant 0 : index
    %86 = vector.load %arg19[%c0_59, %c0_60] : memref<256x128xbf16, #tpu.memory_space<vmem>>, vector<256x128xbf16>
    %cst_61 = arith.constant dense<0.000000e+00> : vector<8x128xf32>
    %87 = tpu.matmul %85, %86, %cst_61 {dimension_numbers = #tpu.dot_dimension_numbers<[1], [0], [0], [1], [0, 0, 1, 1], [], []>} : vector<8x256xbf16>, vector<256x128xbf16>, vector<8x128xf32> -> vector<8x128xf32>
    %88 = arith.addf %84, %87 : vector<8x128xf32>
    %c0_62 = arith.constant 0 : index
    %c0_63 = arith.constant 0 : index
    %89 = vector.load %arg20[%c0_62, %c0_63] : memref<1x128xf32, #tpu.memory_space<vmem>>, vector<1x128xf32>
    %90 = vector.broadcast %89 : vector<1x128xf32> to vector<8x128xf32>
    %91 = arith.addf %88, %90 : vector<8x128xf32>
    %c0_64 = arith.constant 0 : index
    %c0_65 = arith.constant 0 : index
    %92 = vector.load %arg24[%c0_64, %c0_65] : memref<8x128xf32, #tpu.memory_space<vmem>>, vector<8x128xf32>
    tpu.vector_store %arg24[%c0_64, %c0_65], %91 {strides = array<i32>} : memref<8x128xf32, #tpu.memory_space<vmem>>, vector<8x128xf32>,
    return
  }
  func.func @transform_0(%arg0: i32) -> (i32, i32) {
    %c0_i32 = arith.constant 0 : i32
    %c0_i32_0 = arith.constant 0 : i32
    return %arg0, %c0_i32 : i32, i32
  }
  func.func @transform_1(%arg0: i32) -> (i32, i32) {
    %c0_i32 = arith.constant 0 : i32
    %c0_i32_0 = arith.constant 0 : i32
    return %arg0, %c0_i32 : i32, i32
  }
  func.func @transform_2(%arg0: i32) -> (i32, i32) {
    %c0_i32 = arith.constant 0 : i32
    %c0_i32_0 = arith.constant 0 : i32
    %c0_i32_1 = arith.constant 0 : i32
    return %c0_i32, %c0_i32_0 : i32, i32
  }
  func.func @transform_3(%arg0: i32) -> (i32, i32) {
    %c0_i32 = arith.constant 0 : i32
    %c0_i32_0 = arith.constant 0 : i32
    %c0_i32_1 = arith.constant 0 : i32
    return %c0_i32, %c0_i32_0 : i32, i32
  }
  func.func @transform_4(%arg0: i32) -> (i32, i32) {
    %c0_i32 = arith.constant 0 : i32
    %c0_i32_0 = arith.constant 0 : i32
    %c0_i32_1 = arith.constant 0 : i32
    return %c0_i32, %c0_i32_0 : i32, i32
  }
  func.func @transform_5(%arg0: i32) -> (i32, i32) {
    %c0_i32 = arith.constant 0 : i32
    %c0_i32_0 = arith.constant 0 : i32
    %c0_i32_1 = arith.constant 0 : i32
    return %c0_i32, %c0_i32_0 : i32, i32
  }
  func.func @transform_6(%arg0: i32) -> (i32, i32) {
    %c0_i32 = arith.constant 0 : i32
    %c0_i32_0 = arith.constant 0 : i32
    %c0_i32_1 = arith.constant 0 : i32
    return %c0_i32, %c0_i32_0 : i32, i32
  }
  func.func @transform_7(%arg0: i32) -> (i32, i32) {
    %c0_i32 = arith.constant 0 : i32
    %c0_i32_0 = arith.constant 0 : i32
    %c0_i32_1 = arith.constant 0 : i32
    return %c0_i32, %c0_i32_0 : i32, i32
  }
  func.func @transform_8(%arg0: i32) -> (i32, i32) {
    %c0_i32 = arith.constant 0 : i32
    %c0_i32_0 = arith.constant 0 : i32
    %c0_i32_1 = arith.constant 0 : i32
    return %c0_i32, %c0_i32_0 : i32, i32
  }
  func.func @transform_9(%arg0: i32) -> (i32, i32) {
    %c0_i32 = arith.constant 0 : i32
    %c0_i32_0 = arith.constant 0 : i32
    %c0_i32_1 = arith.constant 0 : i32
    return %c0_i32, %c0_i32_0 : i32, i32
  }
  func.func @transform_10(%arg0: i32) -> (i32, i32) {
    %c0_i32 = arith.constant 0 : i32
    %c0_i32_0 = arith.constant 0 : i32
    %c0_i32_1 = arith.constant 0 : i32
    return %c0_i32, %c0_i32_0 : i32, i32
  }
  func.func @transform_11(%arg0: i32) -> (i32, i32) {
    %c0_i32 = arith.constant 0 : i32
    %c0_i32_0 = arith.constant 0 : i32
    %c0_i32_1 = arith.constant 0 : i32
    return %c0_i32, %c0_i32_0 : i32, i32
  }
  func.func @transform_12(%arg0: i32) -> (i32, i32) {
    %c0_i32 = arith.constant 0 : i32
    %c0_i32_0 = arith.constant 0 : i32
    %c0_i32_1 = arith.constant 0 : i32
    return %c0_i32, %c0_i32_0 : i32, i32
  }
  func.func @transform_13(%arg0: i32) -> (i32, i32) {
    %c0_i32 = arith.constant 0 : i32
    %c0_i32_0 = arith.constant 0 : i32
    %c0_i32_1 = arith.constant 0 : i32
    return %c0_i32, %c0_i32_0 : i32, i32
  }
  func.func @transform_14(%arg0: i32) -> (i32, i32) {
    %c0_i32 = arith.constant 0 : i32
    %c0_i32_0 = arith.constant 0 : i32
    %c0_i32_1 = arith.constant 0 : i32
    return %c0_i32, %c0_i32_0 : i32, i32
  }
  func.func @transform_15(%arg0: i32) -> (i32, i32) {
    %c0_i32 = arith.constant 0 : i32
    %c0_i32_0 = arith.constant 0 : i32
    %c0_i32_1 = arith.constant 0 : i32
    return %c0_i32, %c0_i32_0 : i32, i32
  }
  func.func @transform_16(%arg0: i32) -> (i32, i32) {
    %c0_i32 = arith.constant 0 : i32
    %c0_i32_0 = arith.constant 0 : i32
    %c0_i32_1 = arith.constant 0 : i32
    return %c0_i32, %c0_i32_0 : i32, i32
  }
  func.func @transform_17(%arg0: i32) -> (i32, i32) {
    %c0_i32 = arith.constant 0 : i32
    %c0_i32_0 = arith.constant 0 : i32
    %c0_i32_1 = arith.constant 0 : i32
    return %c0_i32, %c0_i32_0 : i32, i32
  }
  func.func @transform_18(%arg0: i32) -> (i32, i32) {
    %c0_i32 = arith.constant 0 : i32
    %c0_i32_0 = arith.constant 0 : i32
    %c0_i32_1 = arith.constant 0 : i32
    return %c0_i32, %c0_i32_0 : i32, i32
  }
  func.func @transform_19(%arg0: i32) -> (i32, i32) {
    %c0_i32 = arith.constant 0 : i32
    %c0_i32_0 = arith.constant 0 : i32
    %c0_i32_1 = arith.constant 0 : i32
    return %c0_i32, %c0_i32_0 : i32, i32
  }
  func.func @transform_20(%arg0: i32) -> (i32, i32) {
    %c0_i32 = arith.constant 0 : i32
    %c0_i32_0 = arith.constant 0 : i32
    return %arg0, %c0_i32 : i32, i32
  }
  func.func @transform_21(%arg0: i32) -> (i32, i32) {
    %c0_i32 = arith.constant 0 : i32
    %c0_i32_0 = arith.constant 0 : i32
    return %arg0, %c0_i32 : i32, i32
  }
  func.func @transform_22(%arg0: i32) -> (i32, i32) {
    %c0_i32 = arith.constant 0 : i32
    %c0_i32_0 = arith.constant 0 : i32
    return %arg0, %c0_i32 : i32, i32
  }
  func.func @transform_23(%arg0: i32) -> (i32, i32) {
    %c0_i32 = arith.constant 0 : i32
    %c0_i32_0 = arith.constant 0 : i32
    return %arg0, %c0_i32 : i32, i32
  }
}

</mosaic_0001>

<llo_original>
// kernel: _lambda_.1
$region0: #{_lambda_.1}
  #allocation0 [shape = 'u32[]', space=smem, size = 0x4, offset = 0x4, fixed_abs, tag = 'smem constant byte address 0x4 - core index']
  #allocation1 [shape = 'u32[144,128]{1,0:T(1,128)}', space=vmem, size = 0x12000, scoped, tag = 'internal scratch']
  %s0 = inlined_call_operand.vmem [shape: f32[8,128], index: 0, kind: input, shape index: {}]
  %s1 = inlined_call_operand.vmem [shape: f32[8,2], index: 1, kind: input, shape index: {}]
  %s2 = inlined_call_operand.vmem [shape: f32[2,256], index: 2, kind: input, shape index: {}]
  %s3 = inlined_call_operand.vmem [shape: f32[1,256], index: 3, kind: input, shape index: {}]
  %s4 = inlined_call_operand.hbm [shape: bf16[256,128], index: 4, kind: input, shape index: {}]
  %s5 = inlined_call_operand.vmem [shape: f32[1,128], index: 5, kind: input, shape index: {}]
  %s6 = inlined_call_operand.hbm [shape: bf16[128,512], index: 6, kind: input, shape index: {}]
  %s7 = inlined_call_operand.hbm [shape: bf16[128,512], index: 7, kind: input, shape index: {}]
  %s8 = inlined_call_operand.vmem [shape: f32[1,512], index: 8, kind: input, shape index: {}]
  %s9 = inlined_call_operand.hbm [shape: bf16[256,256], index: 9, kind: input, shape index: {}]
  %s10 = inlined_call_operand.vmem [shape: f32[1,256], index: 10, kind: input, shape index: {}]
  %s11 = inlined_call_operand.hbm [shape: bf16[256,256], index: 11, kind: input, shape index: {}]
  %s12 = inlined_call_operand.vmem [shape: f32[1,256], index: 12, kind: input, shape index: {}]
  %s13 = inlined_call_operand.hbm [shape: bf16[256,256], index: 13, kind: input, shape index: {}]
  %s14 = inlined_call_operand.vmem [shape: f32[1,256], index: 14, kind: input, shape index: {}]
  %s15 = inlined_call_operand.hbm [shape: bf16[256,256], index: 15, kind: input, shape index: {}]
  %s16 = inlined_call_operand.vmem [shape: f32[1,256], index: 16, kind: input, shape index: {}]
  %s17 = inlined_call_operand.hbm [shape: bf16[256,128], index: 17, kind: input, shape index: {}]
  %s18 = inlined_call_operand.hbm [shape: bf16[256,128], index: 18, kind: input, shape index: {}]
  %s19 = inlined_call_operand.vmem [shape: f32[1,128], index: 19, kind: input, shape index: {}]
  %s20 = inlined_call_operand.vmem [shape: f32[8,512], index: 20, kind: output, shape index: {0}]
  %s21 = inlined_call_operand.vmem [shape: f32[8,512], index: 21, kind: output, shape index: {1}]
  %s22 = inlined_call_operand.vmem [shape: f32[8,512], index: 22, kind: output, shape index: {2}]
  %s23 = inlined_call_operand.vmem [shape: f32[8,128], index: 23, kind: output, shape index: {3}]
  %24 = xla_tuple %s20, %s21, %s22, %s23
  %s25 = sld [smem:[#allocation0]]
  $region150: #{_lambda_.1} parent=0
    _
  %s27 = ssub.s32 1, %s25
  %s28 = scalar_select 0, %s27, %s25
  $region1: #{_lambda_.1} parent=0
    #allocation2 [shape = 'u8[65536]{0}', space=vmem, size = 0x10000, scoped, tag = 'input window, operand 4, single buffered']
    #allocation3 [shape = 's32[1]{0}', space=sflag, size = 0x4, scoped, tag = 'scoped memory for _lambda_.1']
    #allocation4 [shape = 'u8[131072]{0}', space=vmem, size = 0x20000, scoped, tag = 'input window, operand 6, single buffered']
    #allocation5 [shape = 's32[1]{0}', space=sflag, size = 0x4, scoped, tag = 'scoped memory for _lambda_.1']
    #allocation6 [shape = 'u8[131072]{0}', space=vmem, size = 0x20000, scoped, tag = 'input window, operand 7, single buffered']
    #allocation7 [shape = 'u8[131072]{0}', space=vmem, size = 0x20000, scoped, tag = 'input window, operand 9, single buffered']
    #allocation8 [shape = 's32[1]{0}', space=sflag, size = 0x4, scoped, tag = 'scoped memory for _lambda_.1']
    #allocation9 [shape = 'u8[131072]{0}', space=vmem, size = 0x20000, scoped, tag = 'input window, operand 11, single buffered']
    #allocation10 [shape = 'u8[131072]{0}', space=vmem, size = 0x20000, scoped, tag = 'input window, operand 13, single buffered']
    #allocation11 [shape = 's32[1]{0}', space=sflag, size = 0x4, scoped, tag = 'scoped memory for _lambda_.1']
    #allocation12 [shape = 'u8[131072]{0}', space=vmem, size = 0x20000, scoped, tag = 'input window, operand 15, single buffered']
    #allocation13 [shape = 'u8[65536]{0}', space=vmem, size = 0x10000, scoped, tag = 'input window, operand 17, single buffered']
    #allocation14 [shape = 's32[1]{0}', space=sflag, size = 0x4, scoped, tag = 'scoped memory for _lambda_.1']
    #allocation15 [shape = 'u8[65536]{0}', space=vmem, size = 0x10000, scoped, tag = 'input window, operand 18, single buffered']
    %29 = vsyncpa [#allocation3], 0
    %30 = vsyncpa [#allocation5], 0
    %31 = vsyncpa [#allocation8], 0
    %32 = vsyncpa [#allocation11], 0
    %33 = vsyncpa [#allocation14], 0
    // Predicated region
    $region2: #{_lambda_.1} parent=1 // pred_check
      _
    $region3: #{_lambda_.1} parent=1 // pred_check_branch
      %35 = sbr.rel (0) target = $region5
    $region4: #{_lambda_.1} parent=1 // pred_region
      _
    $region5: #{_lambda_.1} parent=1 // pred_fallthru
      _
    // Predicated region
    $region6: #{_lambda_.1} parent=1 // pred_check
      _
    $region7: #{_lambda_.1} parent=1 // pred_check_branch
      %37 = sbr.rel (0) target = $region9
    $region8: #{_lambda_.1} parent=1 // pred_region
      _
    $region9: #{_lambda_.1} parent=1 // pred_fallthru
      _
    // Predicated region
    $region10: #{_lambda_.1} parent=1 // pred_check
      _
    $region11: #{_lambda_.1} parent=1 // pred_check_branch
      %39 = sbr.rel (0) target = $region13
    $region12: #{_lambda_.1} parent=1 // pred_region
      _
    $region13: #{_lambda_.1} parent=1 // pred_fallthru
      _
    // Predicated region
    $region14: #{_lambda_.1} parent=1 // pred_check
      _
    $region15: #{_lambda_.1} parent=1 // pred_check_branch
      %41 = sbr.rel (0) target = $region17
    $region16: #{_lambda_.1} parent=1 // pred_region
      _
    $region17: #{_lambda_.1} parent=1 // pred_fallthru
      _
    // Predicated region
    $region18: #{_lambda_.1} parent=1 // pred_check
      _
    $region19: #{_lambda_.1} parent=1 // pred_check_branch
      %43 = sbr.rel (0) target = $region21
    $region20: #{_lambda_.1} parent=1 // pred_region
      %s45 = ssub.s32 2048, 2048
      %46 = vsyncadd [#allocation3], %s45
      %s47 = sshll.u32 [#allocation2], 4
      %s48 = int_to_ptr.vmem [resolvable:$true] %s47
      %53 = dma.hbm_to_vmem [thread:$0]  %s4, 2048, %s48, [#allocation3], 64, 64, 4
    $region21: #{_lambda_.1} parent=1 // pred_fallthru
      _
    // Predicated region
    $region22: #{_lambda_.1} parent=1 // pred_check
      _
    $region23: #{_lambda_.1} parent=1 // pred_check_branch
      %55 = sbr.rel (0) target = $region25
    $region24: #{_lambda_.1} parent=1 // pred_region
      _
    $region25: #{_lambda_.1} parent=1 // pred_fallthru
      _
    // Predicated region
    $region26: #{_lambda_.1} parent=1 // pred_check
      _
    $region27: #{_lambda_.1} parent=1 // pred_check_branch
      %57 = sbr.rel (0) target = $region29
    $region28: #{_lambda_.1} parent=1 // pred_region
      %s59 = ssub.s32 4096, 4096
      %60 = vsyncadd [#allocation5], %s59
      %s61 = sshll.u32 [#allocation4], 4
      %s62 = int_to_ptr.vmem [resolvable:$true] %s61
      %67 = dma.hbm_to_vmem [thread:$0]  %s6, 4096, %s62, [#allocation5], 256, 256, 16
    $region29: #{_lambda_.1} parent=1 // pred_fallthru
      _
    // Predicated region
    $region30: #{_lambda_.1} parent=1 // pred_check
      _
    $region31: #{_lambda_.1} parent=1 // pred_check_branch
      %69 = sbr.rel (0) target = $region33
    $region32: #{_lambda_.1} parent=1 // pred_region
      %s71 = ssub.s32 4096, 4096
      %72 = vsyncadd [#allocation5], %s71
      %s73 = sshll.u32 [#allocation6], 4
      %s74 = int_to_ptr.vmem [resolvable:$true] %s73
      %79 = dma.hbm_to_vmem [thread:$0]  %s7, 4096, %s74, [#allocation5], 256, 256, 16
    $region33: #{_lambda_.1} parent=1 // pred_fallthru
      _
    // Predicated region
    $region34: #{_lambda_.1} parent=1 // pred_check
      _
    $region35: #{_lambda_.1} parent=1 // pred_check_branch
      %81 = sbr.rel (0) target = $region37
    $region36: #{_lambda_.1} parent=1 // pred_region
      _
    $region37: #{_lambda_.1} parent=1 // pred_fallthru
      _
    // Predicated region
    $region38: #{_lambda_.1} parent=1 // pred_check
      _
    $region39: #{_lambda_.1} parent=1 // pred_check_branch
      %83 = sbr.rel (0) target = $region41
    $region40: #{_lambda_.1} parent=1 // pred_region
      %s85 = ssub.s32 4096, 4096
      %86 = vsyncadd [#allocation8], %s85
      %s87 = sshll.u32 [#allocation7], 4
      %s88 = int_to_ptr.vmem [resolvable:$true] %s87
      %93 = dma.hbm_to_vmem [thread:$0]  %s9, 4096, %s88, [#allocation8], 128, 128, 8
    $region41: #{_lambda_.1} parent=1 // pred_fallthru
      _
    // Predicated region
    $region42: #{_lambda_.1} parent=1 // pred_check
      _
    $region43: #{_lambda_.1} parent=1 // pred_check_branch
      %95 = sbr.rel (0) target = $region45
    $region44: #{_lambda_.1} parent=1 // pred_region
      _
    $region45: #{_lambda_.1} parent=1 // pred_fallthru
      _
    // Predicated region
    $region46: #{_lambda_.1} parent=1 // pred_check
      _
    $region47: #{_lambda_.1} parent=1 // pred_check_branch
      %97 = sbr.rel (0) target = $region49
    $region48: #{_lambda_.1} parent=1 // pred_region
      %s99 = ssub.s32 4096, 4096
      %100 = vsyncadd [#allocation8], %s99
      %s101 = sshll.u32 [#allocation9], 4
      %s102 = int_to_ptr.vmem [resolvable:$true] %s101
      %107 = dma.hbm_to_vmem [thread:$0]  %s11, 4096, %s102, [#allocation8], 128, 128, 8
    $region49: #{_lambda_.1} parent=1 // pred_fallthru
      _
    // Predicated region
    $region50: #{_lambda_.1} parent=1 // pred_check
      _
    $region51: #{_lambda_.1} parent=1 // pred_check_branch
      %109 = sbr.rel (0) target = $region53
    $region52: #{_lambda_.1} parent=1 // pred_region
      _
    $region53: #{_lambda_.1} parent=1 // pred_fallthru
      _
    // Predicated region
    $region54: #{_lambda_.1} parent=1 // pred_check
      _
    $region55: #{_lambda_.1} parent=1 // pred_check_branch
      %111 = sbr.rel (0) target = $region57
    $region56: #{_lambda_.1} parent=1 // pred_region
      %s113 = ssub.s32 4096, 4096
      %114 = vsyncadd [#allocation11], %s113
      %s115 = sshll.u32 [#allocation10], 4
      %s116 = int_to_ptr.vmem [resolvable:$true] %s115
      %121 = dma.hbm_to_vmem [thread:$0]  %s13, 4096, %s116, [#allocation11], 128, 128, 8
    $region57: #{_lambda_.1} parent=1 // pred_fallthru
      _
    // Predicated region
    $region58: #{_lambda_.1} parent=1 // pred_check
      _
    $region59: #{_lambda_.1} parent=1 // pred_check_branch
      %123 = sbr.rel (0) target = $region61
    $region60: #{_lambda_.1} parent=1 // pred_region
      _
    $region61: #{_lambda_.1} parent=1 // pred_fallthru
      _
    // Predicated region
    $region62: #{_lambda_.1} parent=1 // pred_check
      _
    $region63: #{_lambda_.1} parent=1 // pred_check_branch
      %125 = sbr.rel (0) target = $region65
    $region64: #{_lambda_.1} parent=1 // pred_region
      %s127 = ssub.s32 4096, 4096
      %128 = vsyncadd [#allocation11], %s127
      %s129 = sshll.u32 [#allocation12], 4
      %s130 = int_to_ptr.vmem [resolvable:$true] %s129
      %135 = dma.hbm_to_vmem [thread:$0]  %s15, 4096, %s130, [#allocation11], 128, 128, 8
    $region65: #{_lambda_.1} parent=1 // pred_fallthru
      _
    // Predicated region
    $region66: #{_lambda_.1} parent=1 // pred_check
      _
    $region67: #{_lambda_.1} parent=1 // pred_check_branch
      %137 = sbr.rel (0) target = $region69
    $region68: #{_lambda_.1} parent=1 // pred_region
      _
    $region69: #{_lambda_.1} parent=1 // pred_fallthru
      _
    // Predicated region
    $region70: #{_lambda_.1} parent=1 // pred_check
      _
    $region71: #{_lambda_.1} parent=1 // pred_check_branch
      %139 = sbr.rel (0) target = $region73
    $region72: #{_lambda_.1} parent=1 // pred_region
      %s141 = ssub.s32 2048, 2048
      %142 = vsyncadd [#allocation14], %s141
      %s143 = sshll.u32 [#allocation13], 4
      %s144 = int_to_ptr.vmem [resolvable:$true] %s143
      %149 = dma.hbm_to_vmem [thread:$0]  %s17, 2048, %s144, [#allocation14], 64, 64, 4
    $region73: #{_lambda_.1} parent=1 // pred_fallthru
      _
    // Predicated region
    $region74: #{_lambda_.1} parent=1 // pred_check
      _
    $region75: #{_lambda_.1} parent=1 // pred_check_branch
      %151 = sbr.rel (0) target = $region77
    $region76: #{_lambda_.1} parent=1 // pred_region
      %s153 = ssub.s32 2048, 2048
      %154 = vsyncadd [#allocation14], %s153
      %s155 = sshll.u32 [#allocation15], 4
      %s156 = int_to_ptr.vmem [resolvable:$true] %s155
      %161 = dma.hbm_to_vmem [thread:$0]  %s18, 2048, %s156, [#allocation14], 64, 64, 4
    $region77: #{_lambda_.1} parent=1 // pred_fallthru
      _
    // Predicated region
    $region78: #{_lambda_.1} parent=1 // pred_check
      _
    $region79: #{_lambda_.1} parent=1 // pred_check_branch
      %163 = sbr.rel (0) target = $region81
    $region80: #{_lambda_.1} parent=1 // pred_region
      _
    $region81: #{_lambda_.1} parent=1 // pred_fallthru
      _
    // Predicated region
    $region82: #{_lambda_.1} parent=1 // pred_check
      _
    $region83: #{_lambda_.1} parent=1 // pred_check_branch
      %165 = sbr.rel (0) target = $region85
    $region84: #{_lambda_.1} parent=1 // pred_region
      %166 = dma.done [#allocation3], 2048
    $region85: #{_lambda_.1} parent=1 // pred_fallthru
      _
    // Predicated region
    $region86: #{_lambda_.1} parent=1 // pred_check
      _
    $region87: #{_lambda_.1} parent=1 // pred_check_branch
      %168 = sbr.rel (0) target = $region89
    $region88: #{_lambda_.1} parent=1 // pred_region
      %169 = dma.done [#allocation5], 4096
    $region89: #{_lambda_.1} parent=1 // pred_fallthru
      _
    // Predicated region
    $region90: #{_lambda_.1} parent=1 // pred_check
      _
    $region91: #{_lambda_.1} parent=1 // pred_check_branch
      %171 = sbr.rel (0) target = $region93
    $region92: #{_lambda_.1} parent=1 // pred_region
      %172 = dma.done [#allocation5], 4096
    $region93: #{_lambda_.1} parent=1 // pred_fallthru
      _
    // Predicated region
    $region94: #{_lambda_.1} parent=1 // pred_check
      _
    $region95: #{_lambda_.1} parent=1 // pred_check_branch
      %174 = sbr.rel (0) target = $region97
    $region96: #{_lambda_.1} parent=1 // pred_region
      %175 = dma.done [#allocation8], 4096
    $region97: #{_lambda_.1} parent=1 // pred_fallthru
      _
    // Predicated region
    $region98: #{_lambda_.1} parent=1 // pred_check
      _
    $region99: #{_lambda_.1} parent=1 // pred_check_branch
      %177 = sbr.rel (0) target = $region101
    $region100: #{_lambda_.1} parent=1 // pred_region
      %178 = dma.done [#allocation8], 4096
    $region101: #{_lambda_.1} parent=1 // pred_fallthru
      _
    // Predicated region
    $region102: #{_lambda_.1} parent=1 // pred_check
      _
    $region103: #{_lambda_.1} parent=1 // pred_check_branch
      %180 = sbr.rel (0) target = $region105
    $region104: #{_lambda_.1} parent=1 // pred_region
      %181 = dma.done [#allocation11], 4096
    $region105: #{_lambda_.1} parent=1 // pred_fallthru
      _
    // Predicated region
    $region106: #{_lambda_.1} parent=1 // pred_check
      _
    $region107: #{_lambda_.1} parent=1 // pred_check_branch
      %183 = sbr.rel (0) target = $region109
    $region108: #{_lambda_.1} parent=1 // pred_region
      %184 = dma.done [#allocation11], 4096
    $region109: #{_lambda_.1} parent=1 // pred_fallthru
      _
    // Predicated region
    $region110: #{_lambda_.1} parent=1 // pred_check
      _
    $region111: #{_lambda_.1} parent=1 // pred_check_branch
      %186 = sbr.rel (0) target = $region113
    $region112: #{_lambda_.1} parent=1 // pred_region
      %187 = dma.done [#allocation14], 2048
    $region113: #{_lambda_.1} parent=1 // pred_fallthru
      _
    // Predicated region
    $region114: #{_lambda_.1} parent=1 // pred_check
      _
    $region115: #{_lambda_.1} parent=1 // pred_check_branch
      %189 = sbr.rel (0) target = $region117
    $region116: #{_lambda_.1} parent=1 // pred_region
      %190 = dma.done [#allocation14], 2048
    $region117: #{_lambda_.1} parent=1 // pred_fallthru
      _
    %v192 = vld [vmem:[%s1] sm:$0xff]
    %v193 = vld [vmem:[%s2] sm:$0xf]
    %195 = vset.pattern.permute.xlu0 0
    %196 = vperm.xlu0 %195, %v192
    %v197 = vpop.permute.xlu0 %196
    %v200 = vlaneseq
    %v201 = vshrl.u32 %v200, 7
    %v202 = vsub.s32 0, %v201
    %v203 = vrot.slane %v193, %v202
    %v204 = vlaneseq
    %v205 = vshrl.u32 %v204, 7
    %v206 = vsub.s32 2, %v205
    %v207 = vrot.slane %v193, %v206
    %v210 = vlaneseq
    %v211 = vshrl.u32 %v210, 7
    %v212 = vsub.s32 0, %v211
    %v213 = vrot.slane %v203, %v212
    %v214 = vlaneseq
    %v215 = vshrl.u32 %v214, 7
    %v216 = vsub.s32 0, %v215
    %v217 = vrot.slane %v207, %v216
    %v218 = vmul.f32 %v197, %v213
    %v219 = vmul.f32 %v197, %v217
    %220 = vset.pattern.permute.xlu0 1
    %221 = vperm.xlu0 %220, %v192
    %v222 = vpop.permute.xlu0 %221
    %v224 = vlaneseq
    %v225 = vshrl.u32 %v224, 7
    %v226 = vsub.s32 1, %v225
    %v227 = vrot.slane %v193, %v226
    %v228 = vlaneseq
    %v229 = vshrl.u32 %v228, 7
    %v230 = vsub.s32 3, %v229
    %v231 = vrot.slane %v193, %v230
    %v234 = vlaneseq
    %v235 = vshrl.u32 %v234, 7
    %v236 = vsub.s32 1, %v235
    %v237 = vrot.slane %v227, %v236
    %v238 = vlaneseq
    %v239 = vshrl.u32 %v238, 7
    %v240 = vsub.s32 1, %v239
    %v241 = vrot.slane %v231, %v240
    %v242 = vmul.f32 %v222, %v237
    %v243 = vmul.f32 %v222, %v241
    %v244 = vadd.f32 %v218, %v242
    %v245 = vadd.f32 %v219, %v243
    %v246 = vld [vmem:[%s3] sm:$0x3]
    %v248 = vlaneseq
    %v249 = vshrl.u32 %v248, 7
    %v250 = vsub.s32 0, %v249
    %v251 = vrot.slane %v246, %v250
    %v252 = vlaneseq
    %v253 = vshrl.u32 %v252, 7
    %v254 = vsub.s32 1, %v253
    %v255 = vrot.slane %v246, %v254
    %v258 = vadd.f32 %v244, %v251
    %v259 = vadd.f32 %v245, %v255
    %v260 = vmax.f32 %v258, 0.0
    %v261 = vmax.f32 %v259, 0.0
    %v262 = vpack.c.bf16 %v260, %v260
    %v263 = vpack.c.bf16 %v261, %v261
    %v264 = vld [vmem:[#allocation2] sm:$0xf]
    %v265 = vld [vmem:[#allocation2 + $0x4] sm:$0xf]
    %v266 = vld [vmem:[#allocation2 + $0x8] sm:$0xf]
    %v267 = vld [vmem:[#allocation2 + $0xc] sm:$0xf]
    %v268 = vld [vmem:[#allocation2 + $0x10] sm:$0xf]
    %v269 = vld [vmem:[#allocation2 + $0x14] sm:$0xf]
    %v270 = vld [vmem:[#allocation2 + $0x18] sm:$0xf]
    %v271 = vld [vmem:[#allocation2 + $0x1c] sm:$0xf]
    %v272 = vld [vmem:[#allocation2 + $0x20] sm:$0xf]
    %v273 = vld [vmem:[#allocation2 + $0x24] sm:$0xf]
    %v274 = vld [vmem:[#allocation2 + $0x28] sm:$0xf]
    %v275 = vld [vmem:[#allocation2 + $0x2c] sm:$0xf]
    %v276 = vld [vmem:[#allocation2 + $0x30] sm:$0xf]
    %v277 = vld [vmem:[#allocation2 + $0x34] sm:$0xf]
    %v278 = vld [vmem:[#allocation2 + $0x38] sm:$0xf]
    %v279 = vld [vmem:[#allocation2 + $0x3c] sm:$0xf]
    %v280 = vld [vmem:[#allocation2 + $0x40] sm:$0xf]
    %v281 = vld [vmem:[#allocation2 + $0x44] sm:$0xf]
    %v282 = vld [vmem:[#allocation2 + $0x48] sm:$0xf]
    %v283 = vld [vmem:[#allocation2 + $0x4c] sm:$0xf]
    %v284 = vld [vmem:[#allocation2 + $0x50] sm:$0xf]
    %v285 = vld [vmem:[#allocation2 + $0x54] sm:$0xf]
    %v286 = vld [vmem:[#allocation2 + $0x58] sm:$0xf]
    %v287 = vld [vmem:[#allocation2 + $0x5c] sm:$0xf]
    %v288 = vld [vmem:[#allocation2 + $0x60] sm:$0xf]
    %v289 = vld [vmem:[#allocation2 + $0x64] sm:$0xf]
    %v290 = vld [vmem:[#allocation2 + $0x68] sm:$0xf]
    %v291 = vld [vmem:[#allocation2 + $0x6c] sm:$0xf]
    %v292 = vld [vmem:[#allocation2 + $0x70] sm:$0xf]
    %v293 = vld [vmem:[#allocation2 + $0x74] sm:$0xf]
    %v294 = vld [vmem:[#allocation2 + $0x78] sm:$0xf]
    %v295 = vld [vmem:[#allocation2 + $0x7c] sm:$0xf]
    %v296 = vld [vmem:[%s5] sm:$0x1]
    %v298 = vlaneseq
    %v299 = vshrl.u32 %v298, 7
    %v300 = vsub.s32 0, %v299
    %v301 = vrot.slane %v296, %v300
    %v335 = vunpack.c.l.b16 %v264
    %v336 = vunpack.c.l.b16 %v265
    %v337 = vunpack.c.l.b16 %v266
    %v338 = vunpack.c.l.b16 %v267
    %v339 = vunpack.c.l.b16 %v268
    %v340 = vunpack.c.l.b16 %v269
    %v341 = vunpack.c.l.b16 %v270
    %v342 = vunpack.c.l.b16 %v271
    %v343 = vunpack.c.l.b16 %v272
    %v344 = vunpack.c.l.b16 %v273
    %v345 = vunpack.c.l.b16 %v274
    %v346 = vunpack.c.l.b16 %v275
    %v347 = vunpack.c.l.b16 %v276
    %v348 = vunpack.c.l.b16 %v277
    %v349 = vunpack.c.l.b16 %v278
    %v350 = vunpack.c.l.b16 %v279
    %v351 = vunpack.c.l.b16 %v280
    %v352 = vunpack.c.l.b16 %v281
    %v353 = vunpack.c.l.b16 %v282
    %v354 = vunpack.c.l.b16 %v283
    %v355 = vunpack.c.l.b16 %v284
    %v356 = vunpack.c.l.b16 %v285
    %v357 = vunpack.c.l.b16 %v286
    %v358 = vunpack.c.l.b16 %v287
    %v359 = vunpack.c.l.b16 %v288
    %v360 = vunpack.c.l.b16 %v289
    %v361 = vunpack.c.l.b16 %v290
    %v362 = vunpack.c.l.b16 %v291
    %v363 = vunpack.c.l.b16 %v292
    %v364 = vunpack.c.l.b16 %v293
    %v365 = vunpack.c.l.b16 %v294
    %v366 = vunpack.c.l.b16 %v295
    %v367 = vpack.c.b16 %v336, %v335
    %v368 = vpack.c.b16 %v338, %v337
    %v369 = vpack.c.b16 %v340, %v339
    %v370 = vpack.c.b16 %v342, %v341
    %v371 = vpack.c.b16 %v344, %v343
    %v372 = vpack.c.b16 %v346, %v345
    %v373 = vpack.c.b16 %v348, %v347
    %v374 = vpack.c.b16 %v350, %v349
    %v375 = vpack.c.b16 %v352, %v351
    %v376 = vpack.c.b16 %v354, %v353
    %v377 = vpack.c.b16 %v356, %v355
    %v378 = vpack.c.b16 %v358, %v357
    %v379 = vpack.c.b16 %v360, %v359
    %v380 = vpack.c.b16 %v362, %v361
    %v381 = vpack.c.b16 %v364, %v363
    %v382 = vpack.c.b16 %v366, %v365
    %399 = vmatprep.subr.bf16.mxu0 0
    %400 = vmatpush1.bf16.msra.mxu0 %v367
    %401 = vmatprep.subr.bf16.mxu0 0
    %402 = vmatpush1.bf16.msra.mxu0 %v368
    %403 = vmatprep.subr.bf16.mxu0 0
    %404 = vmatpush1.bf16.msra.mxu0 %v369
    %405 = vmatprep.subr.bf16.mxu0 0
    %406 = vmatpush1.bf16.msra.mxu0 %v370
    %407 = vmatprep.subr.bf16.mxu0 0
    %408 = vmatpush1.bf16.msra.mxu0 %v371
    %409 = vmatprep.subr.bf16.mxu0 0
    %410 = vmatpush1.bf16.msra.mxu0 %v372
    %411 = vmatprep.subr.bf16.mxu0 0
    %412 = vmatpush1.bf16.msra.mxu0 %v373
    %413 = vmatprep.subr.bf16.mxu0 0
    %414 = vmatpush1.bf16.msra.mxu0 %v374
    %415 = vmatprep.subr.bf16.mxu0 0
    %416 = vmatpush1.bf16.msra.mxu0 %v375
    %417 = vmatprep.subr.bf16.mxu0 0
    %418 = vmatpush1.bf16.msra.mxu0 %v376
    %419 = vmatprep.subr.bf16.mxu0 0
    %420 = vmatpush1.bf16.msra.mxu0 %v377
    %421 = vmatprep.subr.bf16.mxu0 0
    %422 = vmatpush1.bf16.msra.mxu0 %v378
    %423 = vmatprep.subr.bf16.mxu0 0
    %424 = vmatpush1.bf16.msra.mxu0 %v379
    %425 = vmatprep.subr.bf16.mxu0 0
    %426 = vmatpush1.bf16.msra.mxu0 %v380
    %427 = vmatprep.subr.bf16.mxu0 0
    %428 = vmatpush1.bf16.msra.mxu0 %v381
    %429 = vmatprep.subr.bf16.mxu0 0
    %430 = vmatpush1.bf16.msra.mxu0 %v382
    %431 = vmatprep.mubr.bf16.mxu0 %v263
    %432 = vmatmul.mubr.bf16.gmra.mrb[0].mxu0 %v262
    %v433 = vpop.f32.mrb[0].mxu0
    %v434 = vadd.f32 %v301, %v433
    %v435 = vpop.f32.mrb[0].mxu0
    %v436 = vpop.f32.mrb[0].mxu0
    %v437 = vpop.f32.mrb[0].mxu0
    %438 = vdwg.mxu0
    %v439 = vsub.f32 0.0, %v434
    %v440 = vmul.f32 %v439, 1.442695
    %v441 = vpow.pop %v440
    %v442 = vadd.f32 %v441, 1.0
    %v443 = vrcp.pop %v442
    %v444 = vld [vmem:[%s0] sm:$0xff]
    %v445 = vpack.c.bf16 %v444, %v444
    %v446 = vld [vmem:[#allocation4] sm:$0xff]
    %v447 = vld [vmem:[#allocation4 + $0x8] sm:$0xff]
    %v448 = vld [vmem:[#allocation4 + $0x10] sm:$0xff]
    %v449 = vld [vmem:[#allocation4 + $0x18] sm:$0xff]
    %v450 = vld [vmem:[#allocation4 + $0x20] sm:$0xff]
    %v451 = vld [vmem:[#allocation4 + $0x28] sm:$0xff]
    %v452 = vld [vmem:[#allocation4 + $0x30] sm:$0xff]
    %v453 = vld [vmem:[#allocation4 + $0x38] sm:$0xff]
    %v454 = vld [vmem:[#allocation4 + $0x40] sm:$0xff]
    %v455 = vld [vmem:[#allocation4 + $0x48] sm:$0xff]
    %v456 = vld [vmem:[#allocation4 + $0x50] sm:$0xff]
    %v457 = vld [vmem:[#allocation4 + $0x58] sm:$0xff]
    %v458 = vld [vmem:[#allocation4 + $0x60] sm:$0xff]
    %v459 = vld [vmem:[#allocation4 + $0x68] sm:$0xff]
    %v460 = vld [vmem:[#allocation4 + $0x70] sm:$0xff]
    %v461 = vld [vmem:[#allocation4 + $0x78] sm:$0xff]
    %v462 = vld [vmem:[#allocation4 + $0x80] sm:$0xff]
    %v463 = vld [vmem:[#allocation4 + $0x88] sm:$0xff]
    %v464 = vld [vmem:[#allocation4 + $0x90] sm:$0xff]
    %v465 = vld [vmem:[#allocation4 + $0x98] sm:$0xff]
    %v466 = vld [vmem:[#allocation4 + $0xa0] sm:$0xff]
    %v467 = vld [vmem:[#allocation4 + $0xa8] sm:$0xff]
    %v468 = vld [vmem:[#allocation4 + $0xb0] sm:$0xff]
    %v469 = vld [vmem:[#allocation4 + $0xb8] sm:$0xff]
    %v470 = vld [vmem:[#allocation4 + $0xc0] sm:$0xff]
    %v471 = vld [vmem:[#allocation4 + $0xc8] sm:$0xff]
    %v472 = vld [vmem:[#allocation4 + $0xd0] sm:$0xff]
    %v473 = vld [vmem:[#allocation4 + $0xd8] sm:$0xff]
    %v474 = vld [vmem:[#allocation4 + $0xe0] sm:$0xff]
    %v475 = vld [vmem:[#allocation4 + $0xe8] sm:$0xff]
    %v476 = vld [vmem:[#allocation4 + $0xf0] sm:$0xff]
    %v477 = vld [vmem:[#allocation4 + $0xf8] sm:$0xff]
    %v478 = vpack.c.bf16 %v443, %v443
    %v479 = vld [vmem:[#allocation6] sm:$0xff]
    %v480 = vld [vmem:[#allocation6 + $0x8] sm:$0xff]
    %v481 = vld [vmem:[#allocation6 + $0x10] sm:$0xff]
    %v482 = vld [vmem:[#allocation6 + $0x18] sm:$0xff]
    %v483 = vld [vmem:[#allocation6 + $0x20] sm:$0xff]
    %v484 = vld [vmem:[#allocation6 + $0x28] sm:$0xff]
    %v485 = vld [vmem:[#allocation6 + $0x30] sm:$0xff]
    %v486 = vld [vmem:[#allocation6 + $0x38] sm:$0xff]
    %v487 = vld [vmem:[#allocation6 + $0x40] sm:$0xff]
    %v488 = vld [vmem:[#allocation6 + $0x48] sm:$0xff]
    %v489 = vld [vmem:[#allocation6 + $0x50] sm:$0xff]
    %v490 = vld [vmem:[#allocation6 + $0x58] sm:$0xff]
    %v491 = vld [vmem:[#allocation6 + $0x60] sm:$0xff]
    %v492 = vld [vmem:[#allocation6 + $0x68] sm:$0xff]
    %v493 = vld [vmem:[#allocation6 + $0x70] sm:$0xff]
    %v494 = vld [vmem:[#allocation6 + $0x78] sm:$0xff]
    %v495 = vld [vmem:[#allocation6 + $0x80] sm:$0xff]
    %v496 = vld [vmem:[#allocation6 + $0x88] sm:$0xff]
    %v497 = vld [vmem:[#allocation6 + $0x90] sm:$0xff]
    %v498 = vld [vmem:[#allocation6 + $0x98] sm:$0xff]
    %v499 = vld [vmem:[#allocation6 + $0xa0] sm:$0xff]
    %v500 = vld [vmem:[#allocation6 + $0xa8] sm:$0xff]
    %v501 = vld [vmem:[#allocation6 + $0xb0] sm:$0xff]
    %v502 = vld [vmem:[#allocation6 + $0xb8] sm:$0xff]
    %v503 = vld [vmem:[#allocation6 + $0xc0] sm:$0xff]
    %v504 = vld [vmem:[#allocation6 + $0xc8] sm:$0xff]
    %v505 = vld [vmem:[#allocation6 + $0xd0] sm:$0xff]
    %v506 = vld [vmem:[#allocation6 + $0xd8] sm:$0xff]
    %v507 = vld [vmem:[#allocation6 + $0xe0] sm:$0xff]
    %v508 = vld [vmem:[#allocation6 + $0xe8] sm:$0xff]
    %v509 = vld [vmem:[#allocation6 + $0xf0] sm:$0xff]
    %v510 = vld [vmem:[#allocation6 + $0xf8] sm:$0xff]
    %v543 = vunpack.c.l.b16 %v479
    %v544 = vunpack.c.h.b16 %v479
    %v545 = vunpack.c.l.b16 %v480
    %v546 = vunpack.c.h.b16 %v480
    %v547 = vunpack.c.l.b16 %v481
    %v548 = vunpack.c.h.b16 %v481
    %v549 = vunpack.c.l.b16 %v482
    %v550 = vunpack.c.h.b16 %v482
    %v551 = vunpack.c.l.b16 %v483
    %v552 = vunpack.c.h.b16 %v483
    %v553 = vunpack.c.l.b16 %v484
    %v554 = vunpack.c.h.b16 %v484
    %v555 = vunpack.c.l.b16 %v485
    %v556 = vunpack.c.h.b16 %v485
    %v557 = vunpack.c.l.b16 %v486
    %v558 = vunpack.c.h.b16 %v486
    %v559 = vunpack.c.l.b16 %v487
    %v560 = vunpack.c.h.b16 %v487
    %v561 = vunpack.c.l.b16 %v488
    %v562 = vunpack.c.h.b16 %v488
    %v563 = vunpack.c.l.b16 %v489
    %v564 = vunpack.c.h.b16 %v489
    %v565 = vunpack.c.l.b16 %v490
    %v566 = vunpack.c.h.b16 %v490
    %v567 = vunpack.c.l.b16 %v491
    %v568 = vunpack.c.h.b16 %v491
    %v569 = vunpack.c.l.b16 %v492
    %v570 = vunpack.c.h.b16 %v492
    %v571 = vunpack.c.l.b16 %v493
    %v572 = vunpack.c.h.b16 %v493
    %v573 = vunpack.c.l.b16 %v494
    %v574 = vunpack.c.h.b16 %v494
    %v575 = vunpack.c.l.b16 %v495
    %v576 = vunpack.c.h.b16 %v495
    %v577 = vunpack.c.l.b16 %v496
    %v578 = vunpack.c.h.b16 %v496
    %v579 = vunpack.c.l.b16 %v497
    %v580 = vunpack.c.h.b16 %v497
    %v581 = vunpack.c.l.b16 %v498
    %v582 = vunpack.c.h.b16 %v498
    %v583 = vunpack.c.l.b16 %v499
    %v584 = vunpack.c.h.b16 %v499
    %v585 = vunpack.c.l.b16 %v500
    %v586 = vunpack.c.h.b16 %v500
    %v587 = vunpack.c.l.b16 %v501
    %v588 = vunpack.c.h.b16 %v501
    %v589 = vunpack.c.l.b16 %v502
    %v590 = vunpack.c.h.b16 %v502
    %v591 = vunpack.c.l.b16 %v503
    %v592 = vunpack.c.h.b16 %v503
    %v593 = vunpack.c.l.b16 %v504
    %v594 = vunpack.c.h.b16 %v504
    %v595 = vunpack.c.l.b16 %v505
    %v596 = vunpack.c.h.b16 %v505
    %v597 = vunpack.c.l.b16 %v506
    %v598 = vunpack.c.h.b16 %v506
    %v599 = vunpack.c.l.b16 %v507
    %v600 = vunpack.c.h.b16 %v507
    %v601 = vunpack.c.l.b16 %v508
    %v602 = vunpack.c.h.b16 %v508
    %v603 = vunpack.c.l.b16 %v509
    %v604 = vunpack.c.h.b16 %v509
    %v605 = vunpack.c.l.b16 %v510
    %v606 = vunpack.c.h.b16 %v510
    %v607 = vpack.c.b16 %v547, %v543
    %v608 = vpack.c.b16 %v548, %v544
    %v609 = vpack.c.b16 %v549, %v545
    %v610 = vpack.c.b16 %v550, %v546
    %v611 = vpack.c.b16 %v555, %v551
    %v612 = vpack.c.b16 %v556, %v552
    %v613 = vpack.c.b16 %v557, %v553
    %v614 = vpack.c.b16 %v558, %v554
    %v615 = vpack.c.b16 %v563, %v559
    %v616 = vpack.c.b16 %v564, %v560
    %v617 = vpack.c.b16 %v565, %v561
    %v618 = vpack.c.b16 %v566, %v562
    %v619 = vpack.c.b16 %v571, %v567
    %v620 = vpack.c.b16 %v572, %v568
    %v621 = vpack.c.b16 %v573, %v569
    %v622 = vpack.c.b16 %v574, %v570
    %v623 = vpack.c.b16 %v579, %v575
    %v624 = vpack.c.b16 %v580, %v576
    %v625 = vpack.c.b16 %v581, %v577
    %v626 = vpack.c.b16 %v582, %v578
    %v627 = vpack.c.b16 %v587, %v583
    %v628 = vpack.c.b16 %v588, %v584
    %v629 = vpack.c.b16 %v589, %v585
    %v630 = vpack.c.b16 %v590, %v586
    %v631 = vpack.c.b16 %v595, %v591
    %v632 = vpack.c.b16 %v596, %v592
    %v633 = vpack.c.b16 %v597, %v593
    %v634 = vpack.c.b16 %v598, %v594
    %v635 = vpack.c.b16 %v603, %v599
    %v636 = vpack.c.b16 %v604, %v600
    %v637 = vpack.c.b16 %v605, %v601
    %v638 = vpack.c.b16 %v606, %v602
    %671 = vmatprep.subr.bf16.mxu0 %v608
    %672 = vmatpush1.bf16.msra.mxu0 %v607
    %673 = vmatprep.subr.bf16.mxu0 %v612
    %674 = vmatpush1.bf16.msra.mxu0 %v611
    %675 = vmatprep.subr.bf16.mxu0 %v616
    %676 = vmatpush1.bf16.msra.mxu0 %v615
    %677 = vmatprep.subr.bf16.mxu0 %v620
    %678 = vmatpush1.bf16.msra.mxu0 %v619
    %679 = vmatprep.subr.bf16.mxu0 %v624
    %680 = vmatpush1.bf16.msra.mxu0 %v623
    %681 = vmatprep.subr.bf16.mxu0 %v628
    %682 = vmatpush1.bf16.msra.mxu0 %v627
    %683 = vmatprep.subr.bf16.mxu0 %v632
    %684 = vmatpush1.bf16.msra.mxu0 %v631
    %685 = vmatprep.subr.bf16.mxu0 %v636
    %686 = vmatpush1.bf16.msra.mxu0 %v635
    %687 = vmatprep.subr.bf16.mxu0 0
    %688 = vmatpush1.bf16.msra.mxu0 0
    %689 = vmatprep.subr.bf16.mxu0 0
    %690 = vmatpush1.bf16.msra.mxu0 0
    %691 = vmatprep.subr.bf16.mxu0 0
    %692 = vmatpush1.bf16.msra.mxu0 0
    %693 = vmatprep.subr.bf16.mxu0 0
    %694 = vmatpush1.bf16.msra.mxu0 0
    %695 = vmatprep.subr.bf16.mxu0 0
    %696 = vmatpush1.bf16.msra.mxu0 0
    %697 = vmatprep.subr.bf16.mxu0 0
    %698 = vmatpush1.bf16.msra.mxu0 0
    %699 = vmatprep.subr.bf16.mxu0 0
    %700 = vmatpush1.bf16.msra.mxu0 0
    %701 = vmatprep.subr.bf16.mxu0 0
    %702 = vmatpush1.bf16.msra.mxu0 0
    %703 = vmatprep.mubr.bf16.mxu0 0
    %704 = vmatmul.mubr.bf16.gmra.mrb[0].mxu0 %v478
    %v705 = vpop.f32.mrb[0].mxu0
    %v706 = vadd.f32 0.0, %v705
    %v707 = vpop.f32.mrb[0].mxu0
    %v708 = vadd.f32 0.0, %v707
    %v709 = vpop.f32.mrb[0].mxu0
    %v710 = vpop.f32.mrb[0].mxu0
    %711 = vdwg.mxu0
    %712 = vmatprep.subr.bf16.mxu0 %v610
    %713 = vmatpush1.bf16.msra.mxu0 %v609
    %714 = vmatprep.subr.bf16.mxu0 %v614
    %715 = vmatpush1.bf16.msra.mxu0 %v613
    %716 = vmatprep.subr.bf16.mxu0 %v618
    %717 = vmatpush1.bf16.msra.mxu0 %v617
    %718 = vmatprep.subr.bf16.mxu0 %v622
    %719 = vmatpush1.bf16.msra.mxu0 %v621
    %720 = vmatprep.subr.bf16.mxu0 %v626
    %721 = vmatpush1.bf16.msra.mxu0 %v625
    %722 = vmatprep.subr.bf16.mxu0 %v630
    %723 = vmatpush1.bf16.msra.mxu0 %v629
    %724 = vmatprep.subr.bf16.mxu0 %v634
    %725 = vmatpush1.bf16.msra.mxu0 %v633
    %726 = vmatprep.subr.bf16.mxu0 %v638
    %727 = vmatpush1.bf16.msra.mxu0 %v637
    %728 = vmatprep.subr.bf16.mxu0 0
    %729 = vmatpush1.bf16.msra.mxu0 0
    %730 = vmatprep.subr.bf16.mxu0 0
    %731 = vmatpush1.bf16.msra.mxu0 0
    %732 = vmatprep.subr.bf16.mxu0 0
    %733 = vmatpush1.bf16.msra.mxu0 0
    %734 = vmatprep.subr.bf16.mxu0 0
    %735 = vmatpush1.bf16.msra.mxu0 0
    %736 = vmatprep.subr.bf16.mxu0 0
    %737 = vmatpush1.bf16.msra.mxu0 0
    %738 = vmatprep.subr.bf16.mxu0 0
    %739 = vmatpush1.bf16.msra.mxu0 0
    %740 = vmatprep.subr.bf16.mxu0 0
    %741 = vmatpush1.bf16.msra.mxu0 0
    %742 = vmatprep.subr.bf16.mxu0 0
    %743 = vmatpush1.bf16.msra.mxu0 0
    %744 = vmatprep.mubr.bf16.mxu0 0
    %745 = vmatmul.mubr.bf16.gmra.mrb[0].mxu0 %v478
    %v746 = vpop.f32.mrb[0].mxu0
    %v747 = vadd.f32 0.0, %v746
    %v748 = vpop.f32.mrb[0].mxu0
    %v749 = vadd.f32 0.0, %v748
    %v750 = vpop.f32.mrb[0].mxu0
    %v751 = vpop.f32.mrb[0].mxu0
    %752 = vdwg.mxu0
    %v785 = vunpack.c.l.b16 %v446
    %v786 = vunpack.c.h.b16 %v446
    %v787 = vunpack.c.l.b16 %v447
    %v788 = vunpack.c.h.b16 %v447
    %v789 = vunpack.c.l.b16 %v448
    %v790 = vunpack.c.h.b16 %v448
    %v791 = vunpack.c.l.b16 %v449
    %v792 = vunpack.c.h.b16 %v449
    %v793 = vunpack.c.l.b16 %v450
    %v794 = vunpack.c.h.b16 %v450
    %v795 = vunpack.c.l.b16 %v451
    %v796 = vunpack.c.h.b16 %v451
    %v797 = vunpack.c.l.b16 %v452
    %v798 = vunpack.c.h.b16 %v452
    %v799 = vunpack.c.l.b16 %v453
    %v800 = vunpack.c.h.b16 %v453
    %v801 = vunpack.c.l.b16 %v454
    %v802 = vunpack.c.h.b16 %v454
    %v803 = vunpack.c.l.b16 %v455
    %v804 = vunpack.c.h.b16 %v455
    %v805 = vunpack.c.l.b16 %v456
    %v806 = vunpack.c.h.b16 %v456
    %v807 = vunpack.c.l.b16 %v457
    %v808 = vunpack.c.h.b16 %v457
    %v809 = vunpack.c.l.b16 %v458
    %v810 = vunpack.c.h.b16 %v458
    %v811 = vunpack.c.l.b16 %v459
    %v812 = vunpack.c.h.b16 %v459
    %v813 = vunpack.c.l.b16 %v460
    %v814 = vunpack.c.h.b16 %v460
    %v815 = vunpack.c.l.b16 %v461
    %v816 = vunpack.c.h.b16 %v461
    %v817 = vunpack.c.l.b16 %v462
    %v818 = vunpack.c.h.b16 %v462
    %v819 = vunpack.c.l.b16 %v463
    %v820 = vunpack.c.h.b16 %v463
    %v821 = vunpack.c.l.b16 %v464
    %v822 = vunpack.c.h.b16 %v464
    %v823 = vunpack.c.l.b16 %v465
    %v824 = vunpack.c.h.b16 %v465
    %v825 = vunpack.c.l.b16 %v466
    %v826 = vunpack.c.h.b16 %v466
    %v827 = vunpack.c.l.b16 %v467
    %v828 = vunpack.c.h.b16 %v467
    %v829 = vunpack.c.l.b16 %v468
    %v830 = vunpack.c.h.b16 %v468
    %v831 = vunpack.c.l.b16 %v469
    %v832 = vunpack.c.h.b16 %v469
    %v833 = vunpack.c.l.b16 %v470
    %v834 = vunpack.c.h.b16 %v470
    %v835 = vunpack.c.l.b16 %v471
    %v836 = vunpack.c.h.b16 %v471
    %v837 = vunpack.c.l.b16 %v472
    %v838 = vunpack.c.h.b16 %v472
    %v839 = vunpack.c.l.b16 %v473
    %v840 = vunpack.c.h.b16 %v473
    %v841 = vunpack.c.l.b16 %v474
    %v842 = vunpack.c.h.b16 %v474
    %v843 = vunpack.c.l.b16 %v475
    %v844 = vunpack.c.h.b16 %v475
    %v845 = vunpack.c.l.b16 %v476
    %v846 = vunpack.c.h.b16 %v476
    %v847 = vunpack.c.l.b16 %v477
    %v848 = vunpack.c.h.b16 %v477
    %v849 = vpack.c.b16 %v789, %v785
    %v850 = vpack.c.b16 %v790, %v786
    %v851 = vpack.c.b16 %v791, %v787
    %v852 = vpack.c.b16 %v792, %v788
    %v853 = vpack.c.b16 %v797, %v793
    %v854 = vpack.c.b16 %v798, %v794
    %v855 = vpack.c.b16 %v799, %v795
    %v856 = vpack.c.b16 %v800, %v796
    %v857 = vpack.c.b16 %v805, %v801
    %v858 = vpack.c.b16 %v806, %v802
    %v859 = vpack.c.b16 %v807, %v803
    %v860 = vpack.c.b16 %v808, %v804
    %v861 = vpack.c.b16 %v813, %v809
    %v862 = vpack.c.b16 %v814, %v810
    %v863 = vpack.c.b16 %v815, %v811
    %v864 = vpack.c.b16 %v816, %v812
    %v865 = vpack.c.b16 %v821, %v817
    %v866 = vpack.c.b16 %v822, %v818
    %v867 = vpack.c.b16 %v823, %v819
    %v868 = vpack.c.b16 %v824, %v820
    %v869 = vpack.c.b16 %v829, %v825
    %v870 = vpack.c.b16 %v830, %v826
    %v871 = vpack.c.b16 %v831, %v827
    %v872 = vpack.c.b16 %v832, %v828
    %v873 = vpack.c.b16 %v837, %v833
    %v874 = vpack.c.b16 %v838, %v834
    %v875 = vpack.c.b16 %v839, %v835
    %v876 = vpack.c.b16 %v840, %v836
    %v877 = vpack.c.b16 %v845, %v841
    %v878 = vpack.c.b16 %v846, %v842
    %v879 = vpack.c.b16 %v847, %v843
    %v880 = vpack.c.b16 %v848, %v844
    %913 = vmatprep.subr.bf16.mxu0 %v850
    %914 = vmatpush1.bf16.msra.mxu0 %v849
    %915 = vmatprep.subr.bf16.mxu0 %v854
    %916 = vmatpush1.bf16.msra.mxu0 %v853
    %917 = vmatprep.subr.bf16.mxu0 %v858
    %918 = vmatpush1.bf16.msra.mxu0 %v857
    %919 = vmatprep.subr.bf16.mxu0 %v862
    %920 = vmatpush1.bf16.msra.mxu0 %v861
    %921 = vmatprep.subr.bf16.mxu0 %v866
    %922 = vmatpush1.bf16.msra.mxu0 %v865
    %923 = vmatprep.subr.bf16.mxu0 %v870
    %924 = vmatpush1.bf16.msra.mxu0 %v869
    %925 = vmatprep.subr.bf16.mxu0 %v874
    %926 = vmatpush1.bf16.msra.mxu0 %v873
    %927 = vmatprep.subr.bf16.mxu0 %v878
    %928 = vmatpush1.bf16.msra.mxu0 %v877
    %929 = vmatprep.subr.bf16.mxu0 0
    %930 = vmatpush1.bf16.msra.mxu0 0
    %931 = vmatprep.subr.bf16.mxu0 0
    %932 = vmatpush1.bf16.msra.mxu0 0
    %933 = vmatprep.subr.bf16.mxu0 0
    %934 = vmatpush1.bf16.msra.mxu0 0
    %935 = vmatprep.subr.bf16.mxu0 0
    %936 = vmatpush1.bf16.msra.mxu0 0
    %937 = vmatprep.subr.bf16.mxu0 0
    %938 = vmatpush1.bf16.msra.mxu0 0
    %939 = vmatprep.subr.bf16.mxu0 0
    %940 = vmatpush1.bf16.msra.mxu0 0
    %941 = vmatprep.subr.bf16.mxu0 0
    %942 = vmatpush1.bf16.msra.mxu0 0
    %943 = vmatprep.subr.bf16.mxu0 0
    %944 = vmatpush1.bf16.msra.mxu0 0
    %945 = vmatprep.mubr.bf16.mxu0 0
    %946 = vmatmul.mubr.bf16.gmra.mrb[0].mxu0 %v445
    %v947 = vpop.f32.mrb[0].mxu0
    %v948 = vadd.f32 %v706, %v947
    %v949 = vpop.f32.mrb[0].mxu0
    %v950 = vadd.f32 %v708, %v949
    %v951 = vpop.f32.mrb[0].mxu0
    %v952 = vpop.f32.mrb[0].mxu0
    %953 = vdwg.mxu0
    %954 = vmatprep.subr.bf16.mxu0 %v852
    %955 = vmatpush1.bf16.msra.mxu0 %v851
    %956 = vmatprep.subr.bf16.mxu0 %v856
    %957 = vmatpush1.bf16.msra.mxu0 %v855
    %958 = vmatprep.subr.bf16.mxu0 %v860
    %959 = vmatpush1.bf16.msra.mxu0 %v859
    %960 = vmatprep.subr.bf16.mxu0 %v864
    %961 = vmatpush1.bf16.msra.mxu0 %v863
    %962 = vmatprep.subr.bf16.mxu0 %v868
    %963 = vmatpush1.bf16.msra.mxu0 %v867
    %964 = vmatprep.subr.bf16.mxu0 %v872
    %965 = vmatpush1.bf16.msra.mxu0 %v871
    %966 = vmatprep.subr.bf16.mxu0 %v876
    %967 = vmatpush1.bf16.msra.mxu0 %v875
    %968 = vmatprep.subr.bf16.mxu0 %v880
    %969 = vmatpush1.bf16.msra.mxu0 %v879
    %970 = vmatprep.subr.bf16.mxu0 0
    %971 = vmatpush1.bf16.msra.mxu0 0
    %972 = vmatprep.subr.bf16.mxu0 0
    %973 = vmatpush1.bf16.msra.mxu0 0
    %974 = vmatprep.subr.bf16.mxu0 0
    %975 = vmatpush1.bf16.msra.mxu0 0
    %976 = vmatprep.subr.bf16.mxu0 0
    %977 = vmatpush1.bf16.msra.mxu0 0
    %978 = vmatprep.subr.bf16.mxu0 0
    %979 = vmatpush1.bf16.msra.mxu0 0
    %980 = vmatprep.subr.bf16.mxu0 0
    %981 = vmatpush1.bf16.msra.mxu0 0
    %982 = vmatprep.subr.bf16.mxu0 0
    %983 = vmatpush1.bf16.msra.mxu0 0
    %984 = vmatprep.subr.bf16.mxu0 0
    %985 = vmatpush1.bf16.msra.mxu0 0
    %986 = vmatprep.mubr.bf16.mxu0 0
    %987 = vmatmul.mubr.bf16.gmra.mrb[0].mxu0 %v445
    %v988 = vpop.f32.mrb[0].mxu0
    %v989 = vadd.f32 %v747, %v988
    %v990 = vpop.f32.mrb[0].mxu0
    %v991 = vadd.f32 %v749, %v990
    %v992 = vpop.f32.mrb[0].mxu0
    %v993 = vpop.f32.mrb[0].mxu0
    %994 = vdwg.mxu0
    %v995 = vld [vmem:[%s8] sm:$0xf]
    %v997 = vlaneseq
    %v998 = vshrl.u32 %v997, 7
    %v999 = vsub.s32 0, %v998
    %v1000 = vrot.slane %v995, %v999
    %v1001 = vlaneseq
    %v1002 = vshrl.u32 %v1001, 7
    %v1003 = vsub.s32 1, %v1002
    %v1004 = vrot.slane %v995, %v1003
    %v1005 = vlaneseq
    %v1006 = vshrl.u32 %v1005, 7
    %v1007 = vsub.s32 2, %v1006
    %v1008 = vrot.slane %v995, %v1007
    %v1009 = vlaneseq
    %v1010 = vshrl.u32 %v1009, 7
    %v1011 = vsub.s32 3, %v1010
    %v1012 = vrot.slane %v995, %v1011
    %v1017 = vadd.f32 %v948, %v1000
    %v1018 = vadd.f32 %v950, %v1004
    %v1019 = vadd.f32 %v989, %v1008
    %v1020 = vadd.f32 %v991, %v1012
    %v1021 = vmax.f32 %v1017, 0.0
    %v1022 = vmax.f32 %v1018, 0.0
    %v1023 = vmax.f32 %v1019, 0.0
    %v1024 = vmax.f32 %v1020, 0.0
    %1025 = vst [vmem:[%s20] sm:$0xff] %v1021
    %1026 = vst [vmem:[%s20 + $0x8] sm:$0xff] %v1022
    %1027 = vst [vmem:[%s20 + $0x10] sm:$0xff] %v1023
    %1028 = vst [vmem:[%s20 + $0x18] sm:$0xff] %v1024
    %v1029 = vpack.c.bf16 %v1021, %v1021
    %v1030 = vpack.c.bf16 %v1022, %v1022
    %v1031 = vpack.c.bf16 %v1023, %v1023
    %v1032 = vpack.c.bf16 %v1024, %v1024
    %v1033 = vld [vmem:[#allocation7] sm:$0xff]
    %v1034 = vld [vmem:[#allocation7 + $0x8] sm:$0xff]
    %v1035 = vld [vmem:[#allocation7 + $0x10] sm:$0xff]
    %v1036 = vld [vmem:[#allocation7 + $0x18] sm:$0xff]
    %v1037 = vld [vmem:[#allocation7 + $0x20] sm:$0xff]
    %v1038 = vld [vmem:[#allocation7 + $0x28] sm:$0xff]
    %v1039 = vld [vmem:[#allocation7 + $0x30] sm:$0xff]
    %v1040 = vld [vmem:[#allocation7 + $0x38] sm:$0xff]
    %v1041 = vld [vmem:[#allocation7 + $0x40] sm:$0xff]
    %v1042 = vld [vmem:[#allocation7 + $0x48] sm:$0xff]
    %v1043 = vld [vmem:[#allocation7 + $0x50] sm:$0xff]
    %v1044 = vld [vmem:[#allocation7 + $0x58] sm:$0xff]
    %v1045 = vld [vmem:[#allocation7 + $0x60] sm:$0xff]
    %v1046 = vld [vmem:[#allocation7 + $0x68] sm:$0xff]
    %v1047 = vld [vmem:[#allocation7 + $0x70] sm:$0xff]
    %v1048 = vld [vmem:[#allocation7 + $0x78] sm:$0xff]
    %v1049 = vld [vmem:[#allocation7 + $0x80] sm:$0xff]
    %v1050 = vld [vmem:[#allocation7 + $0x88] sm:$0xff]
    %v1051 = vld [vmem:[#allocation7 + $0x90] sm:$0xff]
    %v1052 = vld [vmem:[#allocation7 + $0x98] sm:$0xff]
    %v1053 = vld [vmem:[#allocation7 + $0xa0] sm:$0xff]
    %v1054 = vld [vmem:[#allocation7 + $0xa8] sm:$0xff]
    %v1055 = vld [vmem:[#allocation7 + $0xb0] sm:$0xff]
    %v1056 = vld [vmem:[#allocation7 + $0xb8] sm:$0xff]
    %v1057 = vld [vmem:[#allocation7 + $0xc0] sm:$0xff]
    %v1058 = vld [vmem:[#allocation7 + $0xc8] sm:$0xff]
    %v1059 = vld [vmem:[#allocation7 + $0xd0] sm:$0xff]
    %v1060 = vld [vmem:[#allocation7 + $0xd8] sm:$0xff]
    %v1061 = vld [vmem:[#allocation7 + $0xe0] sm:$0xff]
    %v1062 = vld [vmem:[#allocation7 + $0xe8] sm:$0xff]
    %v1063 = vld [vmem:[#allocation7 + $0xf0] sm:$0xff]
    %v1064 = vld [vmem:[#allocation7 + $0xf8] sm:$0xff]
    %v1065 = vld [vmem:[%s10] sm:$0x3]
    %v1067 = vlaneseq
    %v1068 = vshrl.u32 %v1067, 7
    %v1069 = vsub.s32 0, %v1068
    %v1070 = vrot.slane %v1065, %v1069
    %v1071 = vlaneseq
    %v1072 = vshrl.u32 %v1071, 7
    %v1073 = vsub.s32 1, %v1072
    %v1074 = vrot.slane %v1065, %v1073
    %v1109 = vunpack.c.l.b16 %v1033
    %v1110 = vunpack.c.h.b16 %v1033
    %v1111 = vunpack.c.l.b16 %v1034
    %v1112 = vunpack.c.h.b16 %v1034
    %v1113 = vunpack.c.l.b16 %v1035
    %v1114 = vunpack.c.h.b16 %v1035
    %v1115 = vunpack.c.l.b16 %v1036
    %v1116 = vunpack.c.h.b16 %v1036
    %v1117 = vunpack.c.l.b16 %v1037
    %v1118 = vunpack.c.h.b16 %v1037
    %v1119 = vunpack.c.l.b16 %v1038
    %v1120 = vunpack.c.h.b16 %v1038
    %v1121 = vunpack.c.l.b16 %v1039
    %v1122 = vunpack.c.h.b16 %v1039
    %v1123 = vunpack.c.l.b16 %v1040
    %v1124 = vunpack.c.h.b16 %v1040
    %v1125 = vunpack.c.l.b16 %v1041
    %v1126 = vunpack.c.h.b16 %v1041
    %v1127 = vunpack.c.l.b16 %v1042
    %v1128 = vunpack.c.h.b16 %v1042
    %v1129 = vunpack.c.l.b16 %v1043
    %v1130 = vunpack.c.h.b16 %v1043
    %v1131 = vunpack.c.l.b16 %v1044
    %v1132 = vunpack.c.h.b16 %v1044
    %v1133 = vunpack.c.l.b16 %v1045
    %v1134 = vunpack.c.h.b16 %v1045
    %v1135 = vunpack.c.l.b16 %v1046
    %v1136 = vunpack.c.h.b16 %v1046
    %v1137 = vunpack.c.l.b16 %v1047
    %v1138 = vunpack.c.h.b16 %v1047
    %v1139 = vunpack.c.l.b16 %v1048
    %v1140 = vunpack.c.h.b16 %v1048
    %v1141 = vunpack.c.l.b16 %v1049
    %v1142 = vunpack.c.h.b16 %v1049
    %v1143 = vunpack.c.l.b16 %v1050
    %v1144 = vunpack.c.h.b16 %v1050
    %v1145 = vunpack.c.l.b16 %v1051
    %v1146 = vunpack.c.h.b16 %v1051
    %v1147 = vunpack.c.l.b16 %v1052
    %v1148 = vunpack.c.h.b16 %v1052
    %v1149 = vunpack.c.l.b16 %v1053
    %v1150 = vunpack.c.h.b16 %v1053
    %v1151 = vunpack.c.l.b16 %v1054
    %v1152 = vunpack.c.h.b16 %v1054
    %v1153 = vunpack.c.l.b16 %v1055
    %v1154 = vunpack.c.h.b16 %v1055
    %v1155 = vunpack.c.l.b16 %v1056
    %v1156 = vunpack.c.h.b16 %v1056
    %v1157 = vunpack.c.l.b16 %v1057
    %v1158 = vunpack.c.h.b16 %v1057
    %v1159 = vunpack.c.l.b16 %v1058
    %v1160 = vunpack.c.h.b16 %v1058
    %v1161 = vunpack.c.l.b16 %v1059
    %v1162 = vunpack.c.h.b16 %v1059
    %v1163 = vunpack.c.l.b16 %v1060
    %v1164 = vunpack.c.h.b16 %v1060
    %v1165 = vunpack.c.l.b16 %v1061
    %v1166 = vunpack.c.h.b16 %v1061
    %v1167 = vunpack.c.l.b16 %v1062
    %v1168 = vunpack.c.h.b16 %v1062
    %v1169 = vunpack.c.l.b16 %v1063
    %v1170 = vunpack.c.h.b16 %v1063
    %v1171 = vunpack.c.l.b16 %v1064
    %v1172 = vunpack.c.h.b16 %v1064
    %v1173 = vpack.c.b16 %v1111, %v1109
    %v1174 = vpack.c.b16 %v1112, %v1110
    %v1175 = vpack.c.b16 %v1115, %v1113
    %v1176 = vpack.c.b16 %v1116, %v1114
    %v1177 = vpack.c.b16 %v1119, %v1117
    %v1178 = vpack.c.b16 %v1120, %v1118
    %v1179 = vpack.c.b16 %v1123, %v1121
    %v1180 = vpack.c.b16 %v1124, %v1122
    %v1181 = vpack.c.b16 %v1127, %v1125
    %v1182 = vpack.c.b16 %v1128, %v1126
    %v1183 = vpack.c.b16 %v1131, %v1129
    %v1184 = vpack.c.b16 %v1132, %v1130
    %v1185 = vpack.c.b16 %v1135, %v1133
    %v1186 = vpack.c.b16 %v1136, %v1134
    %v1187 = vpack.c.b16 %v1139, %v1137
    %v1188 = vpack.c.b16 %v1140, %v1138
    %v1189 = vpack.c.b16 %v1143, %v1141
    %v1190 = vpack.c.b16 %v1144, %v1142
    %v1191 = vpack.c.b16 %v1147, %v1145
    %v1192 = vpack.c.b16 %v1148, %v1146
    %v1193 = vpack.c.b16 %v1151, %v1149
    %v1194 = vpack.c.b16 %v1152, %v1150
    %v1195 = vpack.c.b16 %v1155, %v1153
    %v1196 = vpack.c.b16 %v1156, %v1154
    %v1197 = vpack.c.b16 %v1159, %v1157
    %v1198 = vpack.c.b16 %v1160, %v1158
    %v1199 = vpack.c.b16 %v1163, %v1161
    %v1200 = vpack.c.b16 %v1164, %v1162
    %v1201 = vpack.c.b16 %v1167, %v1165
    %v1202 = vpack.c.b16 %v1168, %v1166
    %v1203 = vpack.c.b16 %v1171, %v1169
    %v1204 = vpack.c.b16 %v1172, %v1170
    %1237 = vmatprep.subr.bf16.mxu0 %v1174
    %1238 = vmatpush1.bf16.msra.mxu0 %v1173
    %1239 = vmatprep.subr.bf16.mxu0 %v1176
    %1240 = vmatpush1.bf16.msra.mxu0 %v1175
    %1241 = vmatprep.subr.bf16.mxu0 %v1178
    %1242 = vmatpush1.bf16.msra.mxu0 %v1177
    %1243 = vmatprep.subr.bf16.mxu0 %v1180
    %1244 = vmatpush1.bf16.msra.mxu0 %v1179
    %1245 = vmatprep.subr.bf16.mxu0 %v1182
    %1246 = vmatpush1.bf16.msra.mxu0 %v1181
    %1247 = vmatprep.subr.bf16.mxu0 %v1184
    %1248 = vmatpush1.bf16.msra.mxu0 %v1183
    %1249 = vmatprep.subr.bf16.mxu0 %v1186
    %1250 = vmatpush1.bf16.msra.mxu0 %v1185
    %1251 = vmatprep.subr.bf16.mxu0 %v1188
    %1252 = vmatpush1.bf16.msra.mxu0 %v1187
    %1253 = vmatprep.subr.bf16.mxu0 %v1190
    %1254 = vmatpush1.bf16.msra.mxu0 %v1189
    %1255 = vmatprep.subr.bf16.mxu0 %v1192
    %1256 = vmatpush1.bf16.msra.mxu0 %v1191
    %1257 = vmatprep.subr.bf16.mxu0 %v1194
    %1258 = vmatpush1.bf16.msra.mxu0 %v1193
    %1259 = vmatprep.subr.bf16.mxu0 %v1196
    %1260 = vmatpush1.bf16.msra.mxu0 %v1195
    %1261 = vmatprep.subr.bf16.mxu0 %v1198
    %1262 = vmatpush1.bf16.msra.mxu0 %v1197
    %1263 = vmatprep.subr.bf16.mxu0 %v1200
    %1264 = vmatpush1.bf16.msra.mxu0 %v1199
    %1265 = vmatprep.subr.bf16.mxu0 %v1202
    %1266 = vmatpush1.bf16.msra.mxu0 %v1201
    %1267 = vmatprep.subr.bf16.mxu0 %v1204
    %1268 = vmatpush1.bf16.msra.mxu0 %v1203
    %1269 = vmatprep.mubr.bf16.mxu0 %v1030
    %1270 = vmatmul.mubr.bf16.gmra.mrb[0].mxu0 %v1029
    %v1271 = vpop.f32.mrb[0].mxu0
    %v1272 = vadd.f32 %v1070, %v1271
    %v1273 = vpop.f32.mrb[0].mxu0
    %v1274 = vadd.f32 %v1074, %v1273
    %v1275 = vpop.f32.mrb[0].mxu0
    %v1276 = vpop.f32.mrb[0].mxu0
    %1277 = vdwg.mxu0
    %v1278 = vmax.f32 %v1272, 0.0
    %v1279 = vmax.f32 %v1274, 0.0
    %v1280 = vld [vmem:[#allocation10] sm:$0xff]
    %v1281 = vld [vmem:[#allocation10 + $0x8] sm:$0xff]
    %v1282 = vld [vmem:[#allocation10 + $0x10] sm:$0xff]
    %v1283 = vld [vmem:[#allocation10 + $0x18] sm:$0xff]
    %v1284 = vld [vmem:[#allocation10 + $0x20] sm:$0xff]
    %v1285 = vld [vmem:[#allocation10 + $0x28] sm:$0xff]
    %v1286 = vld [vmem:[#allocation10 + $0x30] sm:$0xff]
    %v1287 = vld [vmem:[#allocation10 + $0x38] sm:$0xff]
    %v1288 = vld [vmem:[#allocation10 + $0x40] sm:$0xff]
    %v1289 = vld [vmem:[#allocation10 + $0x48] sm:$0xff]
    %v1290 = vld [vmem:[#allocation10 + $0x50] sm:$0xff]
    %v1291 = vld [vmem:[#allocation10 + $0x58] sm:$0xff]
    %v1292 = vld [vmem:[#allocation10 + $0x60] sm:$0xff]
    %v1293 = vld [vmem:[#allocation10 + $0x68] sm:$0xff]
    %v1294 = vld [vmem:[#allocation10 + $0x70] sm:$0xff]
    %v1295 = vld [vmem:[#allocation10 + $0x78] sm:$0xff]
    %v1296 = vld [vmem:[#allocation10 + $0x80] sm:$0xff]
    %v1297 = vld [vmem:[#allocation10 + $0x88] sm:$0xff]
    %v1298 = vld [vmem:[#allocation10 + $0x90] sm:$0xff]
    %v1299 = vld [vmem:[#allocation10 + $0x98] sm:$0xff]
    %v1300 = vld [vmem:[#allocation10 + $0xa0] sm:$0xff]
    %v1301 = vld [vmem:[#allocation10 + $0xa8] sm:$0xff]
    %v1302 = vld [vmem:[#allocation10 + $0xb0] sm:$0xff]
    %v1303 = vld [vmem:[#allocation10 + $0xb8] sm:$0xff]
    %v1304 = vld [vmem:[#allocation10 + $0xc0] sm:$0xff]
    %v1305 = vld [vmem:[#allocation10 + $0xc8] sm:$0xff]
    %v1306 = vld [vmem:[#allocation10 + $0xd0] sm:$0xff]
    %v1307 = vld [vmem:[#allocation10 + $0xd8] sm:$0xff]
    %v1308 = vld [vmem:[#allocation10 + $0xe0] sm:$0xff]
    %v1309 = vld [vmem:[#allocation10 + $0xe8] sm:$0xff]
    %v1310 = vld [vmem:[#allocation10 + $0xf0] sm:$0xff]
    %v1311 = vld [vmem:[#allocation10 + $0xf8] sm:$0xff]
    %v1312 = vld [vmem:[%s14] sm:$0x3]
    %v1314 = vlaneseq
    %v1315 = vshrl.u32 %v1314, 7
    %v1316 = vsub.s32 0, %v1315
    %v1317 = vrot.slane %v1312, %v1316
    %v1318 = vlaneseq
    %v1319 = vshrl.u32 %v1318, 7
    %v1320 = vsub.s32 1, %v1319
    %v1321 = vrot.slane %v1312, %v1320
    %v1356 = vunpack.c.l.b16 %v1280
    %v1357 = vunpack.c.h.b16 %v1280
    %v1358 = vunpack.c.l.b16 %v1281
    %v1359 = vunpack.c.h.b16 %v1281
    %v1360 = vunpack.c.l.b16 %v1282
    %v1361 = vunpack.c.h.b16 %v1282
    %v1362 = vunpack.c.l.b16 %v1283
    %v1363 = vunpack.c.h.b16 %v1283
    %v1364 = vunpack.c.l.b16 %v1284
    %v1365 = vunpack.c.h.b16 %v1284
    %v1366 = vunpack.c.l.b16 %v1285
    %v1367 = vunpack.c.h.b16 %v1285
    %v1368 = vunpack.c.l.b16 %v1286
    %v1369 = vunpack.c.h.b16 %v1286
    %v1370 = vunpack.c.l.b16 %v1287
    %v1371 = vunpack.c.h.b16 %v1287
    %v1372 = vunpack.c.l.b16 %v1288
    %v1373 = vunpack.c.h.b16 %v1288
    %v1374 = vunpack.c.l.b16 %v1289
    %v1375 = vunpack.c.h.b16 %v1289
    %v1376 = vunpack.c.l.b16 %v1290
    %v1377 = vunpack.c.h.b16 %v1290
    %v1378 = vunpack.c.l.b16 %v1291
    %v1379 = vunpack.c.h.b16 %v1291
    %v1380 = vunpack.c.l.b16 %v1292
    %v1381 = vunpack.c.h.b16 %v1292
    %v1382 = vunpack.c.l.b16 %v1293
    %v1383 = vunpack.c.h.b16 %v1293
    %v1384 = vunpack.c.l.b16 %v1294
    %v1385 = vunpack.c.h.b16 %v1294
    %v1386 = vunpack.c.l.b16 %v1295
    %v1387 = vunpack.c.h.b16 %v1295
    %v1388 = vunpack.c.l.b16 %v1296
    %v1389 = vunpack.c.h.b16 %v1296
    %v1390 = vunpack.c.l.b16 %v1297
    %v1391 = vunpack.c.h.b16 %v1297
    %v1392 = vunpack.c.l.b16 %v1298
    %v1393 = vunpack.c.h.b16 %v1298
    %v1394 = vunpack.c.l.b16 %v1299
    %v1395 = vunpack.c.h.b16 %v1299
    %v1396 = vunpack.c.l.b16 %v1300
    %v1397 = vunpack.c.h.b16 %v1300
    %v1398 = vunpack.c.l.b16 %v1301
    %v1399 = vunpack.c.h.b16 %v1301
    %v1400 = vunpack.c.l.b16 %v1302
    %v1401 = vunpack.c.h.b16 %v1302
    %v1402 = vunpack.c.l.b16 %v1303
    %v1403 = vunpack.c.h.b16 %v1303
    %v1404 = vunpack.c.l.b16 %v1304
    %v1405 = vunpack.c.h.b16 %v1304
    %v1406 = vunpack.c.l.b16 %v1305
    %v1407 = vunpack.c.h.b16 %v1305
    %v1408 = vunpack.c.l.b16 %v1306
    %v1409 = vunpack.c.h.b16 %v1306
    %v1410 = vunpack.c.l.b16 %v1307
    %v1411 = vunpack.c.h.b16 %v1307
    %v1412 = vunpack.c.l.b16 %v1308
    %v1413 = vunpack.c.h.b16 %v1308
    %v1414 = vunpack.c.l.b16 %v1309
    %v1415 = vunpack.c.h.b16 %v1309
    %v1416 = vunpack.c.l.b16 %v1310
    %v1417 = vunpack.c.h.b16 %v1310
    %v1418 = vunpack.c.l.b16 %v1311
    %v1419 = vunpack.c.h.b16 %v1311
    %v1420 = vpack.c.b16 %v1358, %v1356
    %v1421 = vpack.c.b16 %v1359, %v1357
    %v1422 = vpack.c.b16 %v1362, %v1360
    %v1423 = vpack.c.b16 %v1363, %v1361
    %v1424 = vpack.c.b16 %v1366, %v1364
    %v1425 = vpack.c.b16 %v1367, %v1365
    %v1426 = vpack.c.b16 %v1370, %v1368
    %v1427 = vpack.c.b16 %v1371, %v1369
    %v1428 = vpack.c.b16 %v1374, %v1372
    %v1429 = vpack.c.b16 %v1375, %v1373
    %v1430 = vpack.c.b16 %v1378, %v1376
    %v1431 = vpack.c.b16 %v1379, %v1377
    %v1432 = vpack.c.b16 %v1382, %v1380
    %v1433 = vpack.c.b16 %v1383, %v1381
    %v1434 = vpack.c.b16 %v1386, %v1384
    %v1435 = vpack.c.b16 %v1387, %v1385
    %v1436 = vpack.c.b16 %v1390, %v1388
    %v1437 = vpack.c.b16 %v1391, %v1389
    %v1438 = vpack.c.b16 %v1394, %v1392
    %v1439 = vpack.c.b16 %v1395, %v1393
    %v1440 = vpack.c.b16 %v1398, %v1396
    %v1441 = vpack.c.b16 %v1399, %v1397
    %v1442 = vpack.c.b16 %v1402, %v1400
    %v1443 = vpack.c.b16 %v1403, %v1401
    %v1444 = vpack.c.b16 %v1406, %v1404
    %v1445 = vpack.c.b16 %v1407, %v1405
    %v1446 = vpack.c.b16 %v1410, %v1408
    %v1447 = vpack.c.b16 %v1411, %v1409
    %v1448 = vpack.c.b16 %v1414, %v1412
    %v1449 = vpack.c.b16 %v1415, %v1413
    %v1450 = vpack.c.b16 %v1418, %v1416
    %v1451 = vpack.c.b16 %v1419, %v1417
    %1484 = vmatprep.subr.bf16.mxu0 %v1421
    %1485 = vmatpush1.bf16.msra.mxu0 %v1420
    %1486 = vmatprep.subr.bf16.mxu0 %v1423
    %1487 = vmatpush1.bf16.msra.mxu0 %v1422
    %1488 = vmatprep.subr.bf16.mxu0 %v1425
    %1489 = vmatpush1.bf16.msra.mxu0 %v1424
    %1490 = vmatprep.subr.bf16.mxu0 %v1427
    %1491 = vmatpush1.bf16.msra.mxu0 %v1426
    %1492 = vmatprep.subr.bf16.mxu0 %v1429
    %1493 = vmatpush1.bf16.msra.mxu0 %v1428
    %1494 = vmatprep.subr.bf16.mxu0 %v1431
    %1495 = vmatpush1.bf16.msra.mxu0 %v1430
    %1496 = vmatprep.subr.bf16.mxu0 %v1433
    %1497 = vmatpush1.bf16.msra.mxu0 %v1432
    %1498 = vmatprep.subr.bf16.mxu0 %v1435
    %1499 = vmatpush1.bf16.msra.mxu0 %v1434
    %1500 = vmatprep.subr.bf16.mxu0 %v1437
    %1501 = vmatpush1.bf16.msra.mxu0 %v1436
    %1502 = vmatprep.subr.bf16.mxu0 %v1439
    %1503 = vmatpush1.bf16.msra.mxu0 %v1438
    %1504 = vmatprep.subr.bf16.mxu0 %v1441
    %1505 = vmatpush1.bf16.msra.mxu0 %v1440
    %1506 = vmatprep.subr.bf16.mxu0 %v1443
    %1507 = vmatpush1.bf16.msra.mxu0 %v1442
    %1508 = vmatprep.subr.bf16.mxu0 %v1445
    %1509 = vmatpush1.bf16.msra.mxu0 %v1444
    %1510 = vmatprep.subr.bf16.mxu0 %v1447
    %1511 = vmatpush1.bf16.msra.mxu0 %v1446
    %1512 = vmatprep.subr.bf16.mxu0 %v1449
    %1513 = vmatpush1.bf16.msra.mxu0 %v1448
    %1514 = vmatprep.subr.bf16.mxu0 %v1451
    %1515 = vmatpush1.bf16.msra.mxu0 %v1450
    %1516 = vmatprep.mubr.bf16.mxu0 %v1032
    %1517 = vmatmul.mubr.bf16.gmra.mrb[0].mxu0 %v1031
    %v1518 = vpop.f32.mrb[0].mxu0
    %v1519 = vadd.f32 %v1317, %v1518
    %v1520 = vpop.f32.mrb[0].mxu0
    %v1521 = vadd.f32 %v1321, %v1520
    %v1522 = vpop.f32.mrb[0].mxu0
    %v1523 = vpop.f32.mrb[0].mxu0
    %1524 = vdwg.mxu0
    %v1525 = vmax.f32 %v1519, 0.0
    %v1526 = vmax.f32 %v1521, 0.0
    %1527 = vst [vmem:[%s21] sm:$0xff] %v1278
    %1528 = vst [vmem:[%s21 + $0x8] sm:$0xff] %v1279
    %1529 = vst [vmem:[%s21 + $0x10] sm:$0xff] %v1525
    %1530 = vst [vmem:[%s21 + $0x18] sm:$0xff] %v1526
    %v1531 = vpack.c.bf16 %v1278, %v1278
    %v1532 = vpack.c.bf16 %v1279, %v1279
    %v1533 = vld [vmem:[#allocation9] sm:$0xff]
    %v1534 = vld [vmem:[#allocation9 + $0x8] sm:$0xff]
    %v1535 = vld [vmem:[#allocation9 + $0x10] sm:$0xff]
    %v1536 = vld [vmem:[#allocation9 + $0x18] sm:$0xff]
    %v1537 = vld [vmem:[#allocation9 + $0x20] sm:$0xff]
    %v1538 = vld [vmem:[#allocation9 + $0x28] sm:$0xff]
    %v1539 = vld [vmem:[#allocation9 + $0x30] sm:$0xff]
    %v1540 = vld [vmem:[#allocation9 + $0x38] sm:$0xff]
    %v1541 = vld [vmem:[#allocation9 + $0x40] sm:$0xff]
    %v1542 = vld [vmem:[#allocation9 + $0x48] sm:$0xff]
    %v1543 = vld [vmem:[#allocation9 + $0x50] sm:$0xff]
    %v1544 = vld [vmem:[#allocation9 + $0x58] sm:$0xff]
    %v1545 = vld [vmem:[#allocation9 + $0x60] sm:$0xff]
    %v1546 = vld [vmem:[#allocation9 + $0x68] sm:$0xff]
    %v1547 = vld [vmem:[#allocation9 + $0x70] sm:$0xff]
    %v1548 = vld [vmem:[#allocation9 + $0x78] sm:$0xff]
    %v1549 = vld [vmem:[#allocation9 + $0x80] sm:$0xff]
    %v1550 = vld [vmem:[#allocation9 + $0x88] sm:$0xff]
    %v1551 = vld [vmem:[#allocation9 + $0x90] sm:$0xff]
    %v1552 = vld [vmem:[#allocation9 + $0x98] sm:$0xff]
    %v1553 = vld [vmem:[#allocation9 + $0xa0] sm:$0xff]
    %v1554 = vld [vmem:[#allocation9 + $0xa8] sm:$0xff]
    %v1555 = vld [vmem:[#allocation9 + $0xb0] sm:$0xff]
    %v1556 = vld [vmem:[#allocation9 + $0xb8] sm:$0xff]
    %v1557 = vld [vmem:[#allocation9 + $0xc0] sm:$0xff]
    %v1558 = vld [vmem:[#allocation9 + $0xc8] sm:$0xff]
    %v1559 = vld [vmem:[#allocation9 + $0xd0] sm:$0xff]
    %v1560 = vld [vmem:[#allocation9 + $0xd8] sm:$0xff]
    %v1561 = vld [vmem:[#allocation9 + $0xe0] sm:$0xff]
    %v1562 = vld [vmem:[#allocation9 + $0xe8] sm:$0xff]
    %v1563 = vld [vmem:[#allocation9 + $0xf0] sm:$0xff]
    %v1564 = vld [vmem:[#allocation9 + $0xf8] sm:$0xff]
    %v1565 = vld [vmem:[%s12] sm:$0x3]
    %v1567 = vlaneseq
    %v1568 = vshrl.u32 %v1567, 7
    %v1569 = vsub.s32 0, %v1568
    %v1570 = vrot.slane %v1565, %v1569
    %v1571 = vlaneseq
    %v1572 = vshrl.u32 %v1571, 7
    %v1573 = vsub.s32 1, %v1572
    %v1574 = vrot.slane %v1565, %v1573
    %v1609 = vunpack.c.l.b16 %v1533
    %v1610 = vunpack.c.h.b16 %v1533
    %v1611 = vunpack.c.l.b16 %v1534
    %v1612 = vunpack.c.h.b16 %v1534
    %v1613 = vunpack.c.l.b16 %v1535
    %v1614 = vunpack.c.h.b16 %v1535
    %v1615 = vunpack.c.l.b16 %v1536
    %v1616 = vunpack.c.h.b16 %v1536
    %v1617 = vunpack.c.l.b16 %v1537
    %v1618 = vunpack.c.h.b16 %v1537
    %v1619 = vunpack.c.l.b16 %v1538
    %v1620 = vunpack.c.h.b16 %v1538
    %v1621 = vunpack.c.l.b16 %v1539
    %v1622 = vunpack.c.h.b16 %v1539
    %v1623 = vunpack.c.l.b16 %v1540
    %v1624 = vunpack.c.h.b16 %v1540
    %v1625 = vunpack.c.l.b16 %v1541
    %v1626 = vunpack.c.h.b16 %v1541
    %v1627 = vunpack.c.l.b16 %v1542
    %v1628 = vunpack.c.h.b16 %v1542
    %v1629 = vunpack.c.l.b16 %v1543
    %v1630 = vunpack.c.h.b16 %v1543
    %v1631 = vunpack.c.l.b16 %v1544
    %v1632 = vunpack.c.h.b16 %v1544
    %v1633 = vunpack.c.l.b16 %v1545
    %v1634 = vunpack.c.h.b16 %v1545
    %v1635 = vunpack.c.l.b16 %v1546
    %v1636 = vunpack.c.h.b16 %v1546
    %v1637 = vunpack.c.l.b16 %v1547
    %v1638 = vunpack.c.h.b16 %v1547
    %v1639 = vunpack.c.l.b16 %v1548
    %v1640 = vunpack.c.h.b16 %v1548
    %v1641 = vunpack.c.l.b16 %v1549
    %v1642 = vunpack.c.h.b16 %v1549
    %v1643 = vunpack.c.l.b16 %v1550
    %v1644 = vunpack.c.h.b16 %v1550
    %v1645 = vunpack.c.l.b16 %v1551
    %v1646 = vunpack.c.h.b16 %v1551
    %v1647 = vunpack.c.l.b16 %v1552
    %v1648 = vunpack.c.h.b16 %v1552
    %v1649 = vunpack.c.l.b16 %v1553
    %v1650 = vunpack.c.h.b16 %v1553
    %v1651 = vunpack.c.l.b16 %v1554
    %v1652 = vunpack.c.h.b16 %v1554
    %v1653 = vunpack.c.l.b16 %v1555
    %v1654 = vunpack.c.h.b16 %v1555
    %v1655 = vunpack.c.l.b16 %v1556
    %v1656 = vunpack.c.h.b16 %v1556
    %v1657 = vunpack.c.l.b16 %v1557
    %v1658 = vunpack.c.h.b16 %v1557
    %v1659 = vunpack.c.l.b16 %v1558
    %v1660 = vunpack.c.h.b16 %v1558
    %v1661 = vunpack.c.l.b16 %v1559
    %v1662 = vunpack.c.h.b16 %v1559
    %v1663 = vunpack.c.l.b16 %v1560
    %v1664 = vunpack.c.h.b16 %v1560
    %v1665 = vunpack.c.l.b16 %v1561
    %v1666 = vunpack.c.h.b16 %v1561
    %v1667 = vunpack.c.l.b16 %v1562
    %v1668 = vunpack.c.h.b16 %v1562
    %v1669 = vunpack.c.l.b16 %v1563
    %v1670 = vunpack.c.h.b16 %v1563
    %v1671 = vunpack.c.l.b16 %v1564
    %v1672 = vunpack.c.h.b16 %v1564
    %v1673 = vpack.c.b16 %v1611, %v1609
    %v1674 = vpack.c.b16 %v1612, %v1610
    %v1675 = vpack.c.b16 %v1615, %v1613
    %v1676 = vpack.c.b16 %v1616, %v1614
    %v1677 = vpack.c.b16 %v1619, %v1617
    %v1678 = vpack.c.b16 %v1620, %v1618
    %v1679 = vpack.c.b16 %v1623, %v1621
    %v1680 = vpack.c.b16 %v1624, %v1622
    %v1681 = vpack.c.b16 %v1627, %v1625
    %v1682 = vpack.c.b16 %v1628, %v1626
    %v1683 = vpack.c.b16 %v1631, %v1629
    %v1684 = vpack.c.b16 %v1632, %v1630
    %v1685 = vpack.c.b16 %v1635, %v1633
    %v1686 = vpack.c.b16 %v1636, %v1634
    %v1687 = vpack.c.b16 %v1639, %v1637
    %v1688 = vpack.c.b16 %v1640, %v1638
    %v1689 = vpack.c.b16 %v1643, %v1641
    %v1690 = vpack.c.b16 %v1644, %v1642
    %v1691 = vpack.c.b16 %v1647, %v1645
    %v1692 = vpack.c.b16 %v1648, %v1646
    %v1693 = vpack.c.b16 %v1651, %v1649
    %v1694 = vpack.c.b16 %v1652, %v1650
    %v1695 = vpack.c.b16 %v1655, %v1653
    %v1696 = vpack.c.b16 %v1656, %v1654
    %v1697 = vpack.c.b16 %v1659, %v1657
    %v1698 = vpack.c.b16 %v1660, %v1658
    %v1699 = vpack.c.b16 %v1663, %v1661
    %v1700 = vpack.c.b16 %v1664, %v1662
    %v1701 = vpack.c.b16 %v1667, %v1665
    %v1702 = vpack.c.b16 %v1668, %v1666
    %v1703 = vpack.c.b16 %v1671, %v1669
    %v1704 = vpack.c.b16 %v1672, %v1670
    %1737 = vmatprep.subr.bf16.mxu0 %v1674
    %1738 = vmatpush1.bf16.msra.mxu0 %v1673
    %1739 = vmatprep.subr.bf16.mxu0 %v1676
    %1740 = vmatpush1.bf16.msra.mxu0 %v1675
    %1741 = vmatprep.subr.bf16.mxu0 %v1678
    %1742 = vmatpush1.bf16.msra.mxu0 %v1677
    %1743 = vmatprep.subr.bf16.mxu0 %v1680
    %1744 = vmatpush1.bf16.msra.mxu0 %v1679
    %1745 = vmatprep.subr.bf16.mxu0 %v1682
    %1746 = vmatpush1.bf16.msra.mxu0 %v1681
    %1747 = vmatprep.subr.bf16.mxu0 %v1684
    %1748 = vmatpush1.bf16.msra.mxu0 %v1683
    %1749 = vmatprep.subr.bf16.mxu0 %v1686
    %1750 = vmatpush1.bf16.msra.mxu0 %v1685
    %1751 = vmatprep.subr.bf16.mxu0 %v1688
    %1752 = vmatpush1.bf16.msra.mxu0 %v1687
    %1753 = vmatprep.subr.bf16.mxu0 %v1690
    %1754 = vmatpush1.bf16.msra.mxu0 %v1689
    %1755 = vmatprep.subr.bf16.mxu0 %v1692
    %1756 = vmatpush1.bf16.msra.mxu0 %v1691
    %1757 = vmatprep.subr.bf16.mxu0 %v1694
    %1758 = vmatpush1.bf16.msra.mxu0 %v1693
    %1759 = vmatprep.subr.bf16.mxu0 %v1696
    %1760 = vmatpush1.bf16.msra.mxu0 %v1695
    %1761 = vmatprep.subr.bf16.mxu0 %v1698
    %1762 = vmatpush1.bf16.msra.mxu0 %v1697
    %1763 = vmatprep.subr.bf16.mxu0 %v1700
    %1764 = vmatpush1.bf16.msra.mxu0 %v1699
    %1765 = vmatprep.subr.bf16.mxu0 %v1702
    %1766 = vmatpush1.bf16.msra.mxu0 %v1701
    %1767 = vmatprep.subr.bf16.mxu0 %v1704
    %1768 = vmatpush1.bf16.msra.mxu0 %v1703
    %1769 = vmatprep.mubr.bf16.mxu0 %v1532
    %1770 = vmatmul.mubr.bf16.gmra.mrb[0].mxu0 %v1531
    %v1771 = vpop.f32.mrb[0].mxu0
    %v1772 = vadd.f32 %v1570, %v1771
    %v1773 = vpop.f32.mrb[0].mxu0
    %v1774 = vadd.f32 %v1574, %v1773
    %v1775 = vpop.f32.mrb[0].mxu0
    %v1776 = vpop.f32.mrb[0].mxu0
    %1777 = vdwg.mxu0
    %v1778 = vmax.f32 %v1772, 0.0
    %v1779 = vmax.f32 %v1774, 0.0
    %v1780 = vpack.c.bf16 %v1525, %v1525
    %v1781 = vpack.c.bf16 %v1526, %v1526
    %v1782 = vld [vmem:[#allocation12] sm:$0xff]
    %v1783 = vld [vmem:[#allocation12 + $0x8] sm:$0xff]
    %v1784 = vld [vmem:[#allocation12 + $0x10] sm:$0xff]
    %v1785 = vld [vmem:[#allocation12 + $0x18] sm:$0xff]
    %v1786 = vld [vmem:[#allocation12 + $0x20] sm:$0xff]
    %v1787 = vld [vmem:[#allocation12 + $0x28] sm:$0xff]
    %v1788 = vld [vmem:[#allocation12 + $0x30] sm:$0xff]
    %v1789 = vld [vmem:[#allocation12 + $0x38] sm:$0xff]
    %v1790 = vld [vmem:[#allocation12 + $0x40] sm:$0xff]
    %v1791 = vld [vmem:[#allocation12 + $0x48] sm:$0xff]
    %v1792 = vld [vmem:[#allocation12 + $0x50] sm:$0xff]
    %v1793 = vld [vmem:[#allocation12 + $0x58] sm:$0xff]
    %v1794 = vld [vmem:[#allocation12 + $0x60] sm:$0xff]
    %v1795 = vld [vmem:[#allocation12 + $0x68] sm:$0xff]
    %v1796 = vld [vmem:[#allocation12 + $0x70] sm:$0xff]
    %v1797 = vld [vmem:[#allocation12 + $0x78] sm:$0xff]
    %v1798 = vld [vmem:[#allocation12 + $0x80] sm:$0xff]
    %v1799 = vld [vmem:[#allocation12 + $0x88] sm:$0xff]
    %v1800 = vld [vmem:[#allocation12 + $0x90] sm:$0xff]
    %v1801 = vld [vmem:[#allocation12 + $0x98] sm:$0xff]
    %v1802 = vld [vmem:[#allocation12 + $0xa0] sm:$0xff]
    %v1803 = vld [vmem:[#allocation12 + $0xa8] sm:$0xff]
    %v1804 = vld [vmem:[#allocation12 + $0xb0] sm:$0xff]
    %v1805 = vld [vmem:[#allocation12 + $0xb8] sm:$0xff]
    %v1806 = vld [vmem:[#allocation12 + $0xc0] sm:$0xff]
    %v1807 = vld [vmem:[#allocation12 + $0xc8] sm:$0xff]
    %v1808 = vld [vmem:[#allocation12 + $0xd0] sm:$0xff]
    %v1809 = vld [vmem:[#allocation12 + $0xd8] sm:$0xff]
    %v1810 = vld [vmem:[#allocation12 + $0xe0] sm:$0xff]
    %v1811 = vld [vmem:[#allocation12 + $0xe8] sm:$0xff]
    %v1812 = vld [vmem:[#allocation12 + $0xf0] sm:$0xff]
    %v1813 = vld [vmem:[#allocation12 + $0xf8] sm:$0xff]
    %v1814 = vld [vmem:[%s16] sm:$0x3]
    %v1816 = vlaneseq
    %v1817 = vshrl.u32 %v1816, 7
    %v1818 = vsub.s32 0, %v1817
    %v1819 = vrot.slane %v1814, %v1818
    %v1820 = vlaneseq
    %v1821 = vshrl.u32 %v1820, 7
    %v1822 = vsub.s32 1, %v1821
    %v1823 = vrot.slane %v1814, %v1822
    %v1858 = vunpack.c.l.b16 %v1782
    %v1859 = vunpack.c.h.b16 %v1782
    %v1860 = vunpack.c.l.b16 %v1783
    %v1861 = vunpack.c.h.b16 %v1783
    %v1862 = vunpack.c.l.b16 %v1784
    %v1863 = vunpack.c.h.b16 %v1784
    %v1864 = vunpack.c.l.b16 %v1785
    %v1865 = vunpack.c.h.b16 %v1785
    %v1866 = vunpack.c.l.b16 %v1786
    %v1867 = vunpack.c.h.b16 %v1786
    %v1868 = vunpack.c.l.b16 %v1787
    %v1869 = vunpack.c.h.b16 %v1787
    %v1870 = vunpack.c.l.b16 %v1788
    %v1871 = vunpack.c.h.b16 %v1788
    %v1872 = vunpack.c.l.b16 %v1789
    %v1873 = vunpack.c.h.b16 %v1789
    %v1874 = vunpack.c.l.b16 %v1790
    %v1875 = vunpack.c.h.b16 %v1790
    %v1876 = vunpack.c.l.b16 %v1791
    %v1877 = vunpack.c.h.b16 %v1791
    %v1878 = vunpack.c.l.b16 %v1792
    %v1879 = vunpack.c.h.b16 %v1792
    %v1880 = vunpack.c.l.b16 %v1793
    %v1881 = vunpack.c.h.b16 %v1793
    %v1882 = vunpack.c.l.b16 %v1794
    %v1883 = vunpack.c.h.b16 %v1794
    %v1884 = vunpack.c.l.b16 %v1795
    %v1885 = vunpack.c.h.b16 %v1795
    %v1886 = vunpack.c.l.b16 %v1796
    %v1887 = vunpack.c.h.b16 %v1796
    %v1888 = vunpack.c.l.b16 %v1797
    %v1889 = vunpack.c.h.b16 %v1797
    %v1890 = vunpack.c.l.b16 %v1798
    %v1891 = vunpack.c.h.b16 %v1798
    %v1892 = vunpack.c.l.b16 %v1799
    %v1893 = vunpack.c.h.b16 %v1799
    %v1894 = vunpack.c.l.b16 %v1800
    %v1895 = vunpack.c.h.b16 %v1800
    %v1896 = vunpack.c.l.b16 %v1801
    %v1897 = vunpack.c.h.b16 %v1801
    %v1898 = vunpack.c.l.b16 %v1802
    %v1899 = vunpack.c.h.b16 %v1802
    %v1900 = vunpack.c.l.b16 %v1803
    %v1901 = vunpack.c.h.b16 %v1803
    %v1902 = vunpack.c.l.b16 %v1804
    %v1903 = vunpack.c.h.b16 %v1804
    %v1904 = vunpack.c.l.b16 %v1805
    %v1905 = vunpack.c.h.b16 %v1805
    %v1906 = vunpack.c.l.b16 %v1806
    %v1907 = vunpack.c.h.b16 %v1806
    %v1908 = vunpack.c.l.b16 %v1807
    %v1909 = vunpack.c.h.b16 %v1807
    %v1910 = vunpack.c.l.b16 %v1808
    %v1911 = vunpack.c.h.b16 %v1808
    %v1912 = vunpack.c.l.b16 %v1809
    %v1913 = vunpack.c.h.b16 %v1809
    %v1914 = vunpack.c.l.b16 %v1810
    %v1915 = vunpack.c.h.b16 %v1810
    %v1916 = vunpack.c.l.b16 %v1811
    %v1917 = vunpack.c.h.b16 %v1811
    %v1918 = vunpack.c.l.b16 %v1812
    %v1919 = vunpack.c.h.b16 %v1812
    %v1920 = vunpack.c.l.b16 %v1813
    %v1921 = vunpack.c.h.b16 %v1813
    %v1922 = vpack.c.b16 %v1860, %v1858
    %v1923 = vpack.c.b16 %v1861, %v1859
    %v1924 = vpack.c.b16 %v1864, %v1862
    %v1925 = vpack.c.b16 %v1865, %v1863
    %v1926 = vpack.c.b16 %v1868, %v1866
    %v1927 = vpack.c.b16 %v1869, %v1867
    %v1928 = vpack.c.b16 %v1872, %v1870
    %v1929 = vpack.c.b16 %v1873, %v1871
    %v1930 = vpack.c.b16 %v1876, %v1874
    %v1931 = vpack.c.b16 %v1877, %v1875
    %v1932 = vpack.c.b16 %v1880, %v1878
    %v1933 = vpack.c.b16 %v1881, %v1879
    %v1934 = vpack.c.b16 %v1884, %v1882
    %v1935 = vpack.c.b16 %v1885, %v1883
    %v1936 = vpack.c.b16 %v1888, %v1886
    %v1937 = vpack.c.b16 %v1889, %v1887
    %v1938 = vpack.c.b16 %v1892, %v1890
    %v1939 = vpack.c.b16 %v1893, %v1891
    %v1940 = vpack.c.b16 %v1896, %v1894
    %v1941 = vpack.c.b16 %v1897, %v1895
    %v1942 = vpack.c.b16 %v1900, %v1898
    %v1943 = vpack.c.b16 %v1901, %v1899
    %v1944 = vpack.c.b16 %v1904, %v1902
    %v1945 = vpack.c.b16 %v1905, %v1903
    %v1946 = vpack.c.b16 %v1908, %v1906
    %v1947 = vpack.c.b16 %v1909, %v1907
    %v1948 = vpack.c.b16 %v1912, %v1910
    %v1949 = vpack.c.b16 %v1913, %v1911
    %v1950 = vpack.c.b16 %v1916, %v1914
    %v1951 = vpack.c.b16 %v1917, %v1915
    %v1952 = vpack.c.b16 %v1920, %v1918
    %v1953 = vpack.c.b16 %v1921, %v1919
    %1986 = vmatprep.subr.bf16.mxu0 %v1923
    %1987 = vmatpush1.bf16.msra.mxu0 %v1922
    %1988 = vmatprep.subr.bf16.mxu0 %v1925
    %1989 = vmatpush1.bf16.msra.mxu0 %v1924
    %1990 = vmatprep.subr.bf16.mxu0 %v1927
    %1991 = vmatpush1.bf16.msra.mxu0 %v1926
    %1992 = vmatprep.subr.bf16.mxu0 %v1929
    %1993 = vmatpush1.bf16.msra.mxu0 %v1928
    %1994 = vmatprep.subr.bf16.mxu0 %v1931
    %1995 = vmatpush1.bf16.msra.mxu0 %v1930
    %1996 = vmatprep.subr.bf16.mxu0 %v1933
    %1997 = vmatpush1.bf16.msra.mxu0 %v1932
    %1998 = vmatprep.subr.bf16.mxu0 %v1935
    %1999 = vmatpush1.bf16.msra.mxu0 %v1934
    %2000 = vmatprep.subr.bf16.mxu0 %v1937
    %2001 = vmatpush1.bf16.msra.mxu0 %v1936
    %2002 = vmatprep.subr.bf16.mxu0 %v1939
    %2003 = vmatpush1.bf16.msra.mxu0 %v1938
    %2004 = vmatprep.subr.bf16.mxu0 %v1941
    %2005 = vmatpush1.bf16.msra.mxu0 %v1940
    %2006 = vmatprep.subr.bf16.mxu0 %v1943
    %2007 = vmatpush1.bf16.msra.mxu0 %v1942
    %2008 = vmatprep.subr.bf16.mxu0 %v1945
    %2009 = vmatpush1.bf16.msra.mxu0 %v1944
    %2010 = vmatprep.subr.bf16.mxu0 %v1947
    %2011 = vmatpush1.bf16.msra.mxu0 %v1946
    %2012 = vmatprep.subr.bf16.mxu0 %v1949
    %2013 = vmatpush1.bf16.msra.mxu0 %v1948
    %2014 = vmatprep.subr.bf16.mxu0 %v1951
    %2015 = vmatpush1.bf16.msra.mxu0 %v1950
    %2016 = vmatprep.subr.bf16.mxu0 %v1953
    %2017 = vmatpush1.bf16.msra.mxu0 %v1952
    %2018 = vmatprep.mubr.bf16.mxu0 %v1781
    %2019 = vmatmul.mubr.bf16.gmra.mrb[0].mxu0 %v1780
    %v2020 = vpop.f32.mrb[0].mxu0
    %v2021 = vadd.f32 %v1819, %v2020
    %v2022 = vpop.f32.mrb[0].mxu0
    %v2023 = vadd.f32 %v1823, %v2022
    %v2024 = vpop.f32.mrb[0].mxu0
    %v2025 = vpop.f32.mrb[0].mxu0
    %2026 = vdwg.mxu0
    %v2027 = vmax.f32 %v2021, 0.0
    %v2028 = vmax.f32 %v2023, 0.0
    %2029 = vst [vmem:[%s22] sm:$0xff] %v1778
    %2030 = vst [vmem:[%s22 + $0x8] sm:$0xff] %v1779
    %2031 = vst [vmem:[%s22 + $0x10] sm:$0xff] %v2027
    %2032 = vst [vmem:[%s22 + $0x18] sm:$0xff] %v2028
    %v2033 = vpack.c.bf16 %v1778, %v1778
    %v2034 = vpack.c.bf16 %v1779, %v1779
    %v2035 = vld [vmem:[#allocation13] sm:$0xf]
    %v2036 = vld [vmem:[#allocation13 + $0x4] sm:$0xf]
    %v2037 = vld [vmem:[#allocation13 + $0x8] sm:$0xf]
    %v2038 = vld [vmem:[#allocation13 + $0xc] sm:$0xf]
    %v2039 = vld [vmem:[#allocation13 + $0x10] sm:$0xf]
    %v2040 = vld [vmem:[#allocation13 + $0x14] sm:$0xf]
    %v2041 = vld [vmem:[#allocation13 + $0x18] sm:$0xf]
    %v2042 = vld [vmem:[#allocation13 + $0x1c] sm:$0xf]
    %v2043 = vld [vmem:[#allocation13 + $0x20] sm:$0xf]
    %v2044 = vld [vmem:[#allocation13 + $0x24] sm:$0xf]
    %v2045 = vld [vmem:[#allocation13 + $0x28] sm:$0xf]
    %v2046 = vld [vmem:[#allocation13 + $0x2c] sm:$0xf]
    %v2047 = vld [vmem:[#allocation13 + $0x30] sm:$0xf]
    %v2048 = vld [vmem:[#allocation13 + $0x34] sm:$0xf]
    %v2049 = vld [vmem:[#allocation13 + $0x38] sm:$0xf]
    %v2050 = vld [vmem:[#allocation13 + $0x3c] sm:$0xf]
    %v2051 = vld [vmem:[#allocation13 + $0x40] sm:$0xf]
    %v2052 = vld [vmem:[#allocation13 + $0x44] sm:$0xf]
    %v2053 = vld [vmem:[#allocation13 + $0x48] sm:$0xf]
    %v2054 = vld [vmem:[#allocation13 + $0x4c] sm:$0xf]
    %v2055 = vld [vmem:[#allocation13 + $0x50] sm:$0xf]
    %v2056 = vld [vmem:[#allocation13 + $0x54] sm:$0xf]
    %v2057 = vld [vmem:[#allocation13 + $0x58] sm:$0xf]
    %v2058 = vld [vmem:[#allocation13 + $0x5c] sm:$0xf]
    %v2059 = vld [vmem:[#allocation13 + $0x60] sm:$0xf]
    %v2060 = vld [vmem:[#allocation13 + $0x64] sm:$0xf]
    %v2061 = vld [vmem:[#allocation13 + $0x68] sm:$0xf]
    %v2062 = vld [vmem:[#allocation13 + $0x6c] sm:$0xf]
    %v2063 = vld [vmem:[#allocation13 + $0x70] sm:$0xf]
    %v2064 = vld [vmem:[#allocation13 + $0x74] sm:$0xf]
    %v2065 = vld [vmem:[#allocation13 + $0x78] sm:$0xf]
    %v2066 = vld [vmem:[#allocation13 + $0x7c] sm:$0xf]
    %v2067 = vpack.c.bf16 %v2027, %v2027
    %v2068 = vpack.c.bf16 %v2028, %v2028
    %v2069 = vld [vmem:[#allocation15] sm:$0xf]
    %v2070 = vld [vmem:[#allocation15 + $0x4] sm:$0xf]
    %v2071 = vld [vmem:[#allocation15 + $0x8] sm:$0xf]
    %v2072 = vld [vmem:[#allocation15 + $0xc] sm:$0xf]
    %v2073 = vld [vmem:[#allocation15 + $0x10] sm:$0xf]
    %v2074 = vld [vmem:[#allocation15 + $0x14] sm:$0xf]
    %v2075 = vld [vmem:[#allocation15 + $0x18] sm:$0xf]
    %v2076 = vld [vmem:[#allocation15 + $0x1c] sm:$0xf]
    %v2077 = vld [vmem:[#allocation15 + $0x20] sm:$0xf]
    %v2078 = vld [vmem:[#allocation15 + $0x24] sm:$0xf]
    %v2079 = vld [vmem:[#allocation15 + $0x28] sm:$0xf]
    %v2080 = vld [vmem:[#allocation15 + $0x2c] sm:$0xf]
    %v2081 = vld [vmem:[#allocation15 + $0x30] sm:$0xf]
    %v2082 = vld [vmem:[#allocation15 + $0x34] sm:$0xf]
    %v2083 = vld [vmem:[#allocation15 + $0x38] sm:$0xf]
    %v2084 = vld [vmem:[#allocation15 + $0x3c] sm:$0xf]
    %v2085 = vld [vmem:[#allocation15 + $0x40] sm:$0xf]
    %v2086 = vld [vmem:[#allocation15 + $0x44] sm:$0xf]
    %v2087 = vld [vmem:[#allocation15 + $0x48] sm:$0xf]
    %v2088 = vld [vmem:[#allocation15 + $0x4c] sm:$0xf]
    %v2089 = vld [vmem:[#allocation15 + $0x50] sm:$0xf]
    %v2090 = vld [vmem:[#allocation15 + $0x54] sm:$0xf]
    %v2091 = vld [vmem:[#allocation15 + $0x58] sm:$0xf]
    %v2092 = vld [vmem:[#allocation15 + $0x5c] sm:$0xf]
    %v2093 = vld [vmem:[#allocation15 + $0x60] sm:$0xf]
    %v2094 = vld [vmem:[#allocation15 + $0x64] sm:$0xf]
    %v2095 = vld [vmem:[#allocation15 + $0x68] sm:$0xf]
    %v2096 = vld [vmem:[#allocation15 + $0x6c] sm:$0xf]
    %v2097 = vld [vmem:[#allocation15 + $0x70] sm:$0xf]
    %v2098 = vld [vmem:[#allocation15 + $0x74] sm:$0xf]
    %v2099 = vld [vmem:[#allocation15 + $0x78] sm:$0xf]
    %v2100 = vld [vmem:[#allocation15 + $0x7c] sm:$0xf]
    %v2133 = vunpack.c.l.b16 %v2069
    %v2134 = vunpack.c.l.b16 %v2070
    %v2135 = vunpack.c.l.b16 %v2071
    %v2136 = vunpack.c.l.b16 %v2072
    %v2137 = vunpack.c.l.b16 %v2073
    %v2138 = vunpack.c.l.b16 %v2074
    %v2139 = vunpack.c.l.b16 %v2075
    %v2140 = vunpack.c.l.b16 %v2076
    %v2141 = vunpack.c.l.b16 %v2077
    %v2142 = vunpack.c.l.b16 %v2078
    %v2143 = vunpack.c.l.b16 %v2079
    %v2144 = vunpack.c.l.b16 %v2080
    %v2145 = vunpack.c.l.b16 %v2081
    %v2146 = vunpack.c.l.b16 %v2082
    %v2147 = vunpack.c.l.b16 %v2083
    %v2148 = vunpack.c.l.b16 %v2084
    %v2149 = vunpack.c.l.b16 %v2085
    %v2150 = vunpack.c.l.b16 %v2086
    %v2151 = vunpack.c.l.b16 %v2087
    %v2152 = vunpack.c.l.b16 %v2088
    %v2153 = vunpack.c.l.b16 %v2089
    %v2154 = vunpack.c.l.b16 %v2090
    %v2155 = vunpack.c.l.b16 %v2091
    %v2156 = vunpack.c.l.b16 %v2092
    %v2157 = vunpack.c.l.b16 %v2093
    %v2158 = vunpack.c.l.b16 %v2094
    %v2159 = vunpack.c.l.b16 %v2095
    %v2160 = vunpack.c.l.b16 %v2096
    %v2161 = vunpack.c.l.b16 %v2097
    %v2162 = vunpack.c.l.b16 %v2098
    %v2163 = vunpack.c.l.b16 %v2099
    %v2164 = vunpack.c.l.b16 %v2100
    %v2165 = vpack.c.b16 %v2134, %v2133
    %v2166 = vpack.c.b16 %v2136, %v2135
    %v2167 = vpack.c.b16 %v2138, %v2137
    %v2168 = vpack.c.b16 %v2140, %v2139
    %v2169 = vpack.c.b16 %v2142, %v2141
    %v2170 = vpack.c.b16 %v2144, %v2143
    %v2171 = vpack.c.b16 %v2146, %v2145
    %v2172 = vpack.c.b16 %v2148, %v2147
    %v2173 = vpack.c.b16 %v2150, %v2149
    %v2174 = vpack.c.b16 %v2152, %v2151
    %v2175 = vpack.c.b16 %v2154, %v2153
    %v2176 = vpack.c.b16 %v2156, %v2155
    %v2177 = vpack.c.b16 %v2158, %v2157
    %v2178 = vpack.c.b16 %v2160, %v2159
    %v2179 = vpack.c.b16 %v2162, %v2161
    %v2180 = vpack.c.b16 %v2164, %v2163
    %2197 = vmatprep.subr.bf16.mxu0 0
    %2198 = vmatpush1.bf16.msra.mxu0 %v2165
    %2199 = vmatprep.subr.bf16.mxu0 0
    %2200 = vmatpush1.bf16.msra.mxu0 %v2166
    %2201 = vmatprep.subr.bf16.mxu0 0
    %2202 = vmatpush1.bf16.msra.mxu0 %v2167
    %2203 = vmatprep.subr.bf16.mxu0 0
    %2204 = vmatpush1.bf16.msra.mxu0 %v2168
    %2205 = vmatprep.subr.bf16.mxu0 0
    %2206 = vmatpush1.bf16.msra.mxu0 %v2169
    %2207 = vmatprep.subr.bf16.mxu0 0
    %2208 = vmatpush1.bf16.msra.mxu0 %v2170
    %2209 = vmatprep.subr.bf16.mxu0 0
    %2210 = vmatpush1.bf16.msra.mxu0 %v2171
    %2211 = vmatprep.subr.bf16.mxu0 0
    %2212 = vmatpush1.bf16.msra.mxu0 %v2172
    %2213 = vmatprep.subr.bf16.mxu0 0
    %2214 = vmatpush1.bf16.msra.mxu0 %v2173
    %2215 = vmatprep.subr.bf16.mxu0 0
    %2216 = vmatpush1.bf16.msra.mxu0 %v2174
    %2217 = vmatprep.subr.bf16.mxu0 0
    %2218 = vmatpush1.bf16.msra.mxu0 %v2175
    %2219 = vmatprep.subr.bf16.mxu0 0
    %2220 = vmatpush1.bf16.msra.mxu0 %v2176
    %2221 = vmatprep.subr.bf16.mxu0 0
    %2222 = vmatpush1.bf16.msra.mxu0 %v2177
    %2223 = vmatprep.subr.bf16.mxu0 0
    %2224 = vmatpush1.bf16.msra.mxu0 %v2178
    %2225 = vmatprep.subr.bf16.mxu0 0
    %2226 = vmatpush1.bf16.msra.mxu0 %v2179
    %2227 = vmatprep.subr.bf16.mxu0 0
    %2228 = vmatpush1.bf16.msra.mxu0 %v2180
    %2229 = vmatprep.mubr.bf16.mxu0 %v2068
    %2230 = vmatmul.mubr.bf16.gmra.mrb[0].mxu0 %v2067
    %v2231 = vpop.f32.mrb[0].mxu0
    %v2232 = vadd.f32 0.0, %v2231
    %v2233 = vpop.f32.mrb[0].mxu0
    %v2234 = vpop.f32.mrb[0].mxu0
    %v2235 = vpop.f32.mrb[0].mxu0
    %2236 = vdwg.mxu0
    %v2269 = vunpack.c.l.b16 %v2035
    %v2270 = vunpack.c.l.b16 %v2036
    %v2271 = vunpack.c.l.b16 %v2037
    %v2272 = vunpack.c.l.b16 %v2038
    %v2273 = vunpack.c.l.b16 %v2039
    %v2274 = vunpack.c.l.b16 %v2040
    %v2275 = vunpack.c.l.b16 %v2041
    %v2276 = vunpack.c.l.b16 %v2042
    %v2277 = vunpack.c.l.b16 %v2043
    %v2278 = vunpack.c.l.b16 %v2044
    %v2279 = vunpack.c.l.b16 %v2045
    %v2280 = vunpack.c.l.b16 %v2046
    %v2281 = vunpack.c.l.b16 %v2047
    %v2282 = vunpack.c.l.b16 %v2048
    %v2283 = vunpack.c.l.b16 %v2049
    %v2284 = vunpack.c.l.b16 %v2050
    %v2285 = vunpack.c.l.b16 %v2051
    %v2286 = vunpack.c.l.b16 %v2052
    %v2287 = vunpack.c.l.b16 %v2053
    %v2288 = vunpack.c.l.b16 %v2054
    %v2289 = vunpack.c.l.b16 %v2055
    %v2290 = vunpack.c.l.b16 %v2056
    %v2291 = vunpack.c.l.b16 %v2057
    %v2292 = vunpack.c.l.b16 %v2058
    %v2293 = vunpack.c.l.b16 %v2059
    %v2294 = vunpack.c.l.b16 %v2060
    %v2295 = vunpack.c.l.b16 %v2061
    %v2296 = vunpack.c.l.b16 %v2062
    %v2297 = vunpack.c.l.b16 %v2063
    %v2298 = vunpack.c.l.b16 %v2064
    %v2299 = vunpack.c.l.b16 %v2065
    %v2300 = vunpack.c.l.b16 %v2066
    %v2301 = vpack.c.b16 %v2270, %v2269
    %v2302 = vpack.c.b16 %v2272, %v2271
    %v2303 = vpack.c.b16 %v2274, %v2273
    %v2304 = vpack.c.b16 %v2276, %v2275
    %v2305 = vpack.c.b16 %v2278, %v2277
    %v2306 = vpack.c.b16 %v2280, %v2279
    %v2307 = vpack.c.b16 %v2282, %v2281
    %v2308 = vpack.c.b16 %v2284, %v2283
    %v2309 = vpack.c.b16 %v2286, %v2285
    %v2310 = vpack.c.b16 %v2288, %v2287
    %v2311 = vpack.c.b16 %v2290, %v2289
    %v2312 = vpack.c.b16 %v2292, %v2291
    %v2313 = vpack.c.b16 %v2294, %v2293
    %v2314 = vpack.c.b16 %v2296, %v2295
    %v2315 = vpack.c.b16 %v2298, %v2297
    %v2316 = vpack.c.b16 %v2300, %v2299
    %2333 = vmatprep.subr.bf16.mxu0 0
    %2334 = vmatpush1.bf16.msra.mxu0 %v2301
    %2335 = vmatprep.subr.bf16.mxu0 0
    %2336 = vmatpush1.bf16.msra.mxu0 %v2302
    %2337 = vmatprep.subr.bf16.mxu0 0
    %2338 = vmatpush1.bf16.msra.mxu0 %v2303
    %2339 = vmatprep.subr.bf16.mxu0 0
    %2340 = vmatpush1.bf16.msra.mxu0 %v2304
    %2341 = vmatprep.subr.bf16.mxu0 0
    %2342 = vmatpush1.bf16.msra.mxu0 %v2305
    %2343 = vmatprep.subr.bf16.mxu0 0
    %2344 = vmatpush1.bf16.msra.mxu0 %v2306
    %2345 = vmatprep.subr.bf16.mxu0 0
    %2346 = vmatpush1.bf16.msra.mxu0 %v2307
    %2347 = vmatprep.subr.bf16.mxu0 0
    %2348 = vmatpush1.bf16.msra.mxu0 %v2308
    %2349 = vmatprep.subr.bf16.mxu0 0
    %2350 = vmatpush1.bf16.msra.mxu0 %v2309
    %2351 = vmatprep.subr.bf16.mxu0 0
    %2352 = vmatpush1.bf16.msra.mxu0 %v2310
    %2353 = vmatprep.subr.bf16.mxu0 0
    %2354 = vmatpush1.bf16.msra.mxu0 %v2311
    %2355 = vmatprep.subr.bf16.mxu0 0
    %2356 = vmatpush1.bf16.msra.mxu0 %v2312
    %2357 = vmatprep.subr.bf16.mxu0 0
    %2358 = vmatpush1.bf16.msra.mxu0 %v2313
    %2359 = vmatprep.subr.bf16.mxu0 0
    %2360 = vmatpush1.bf16.msra.mxu0 %v2314
    %2361 = vmatprep.subr.bf16.mxu0 0
    %2362 = vmatpush1.bf16.msra.mxu0 %v2315
    %2363 = vmatprep.subr.bf16.mxu0 0
    %2364 = vmatpush1.bf16.msra.mxu0 %v2316
    %2365 = vmatprep.mubr.bf16.mxu0 %v2034
    %2366 = vmatmul.mubr.bf16.gmra.mrb[0].mxu0 %v2033
    %v2367 = vpop.f32.mrb[0].mxu0
    %v2368 = vadd.f32 %v2232, %v2367
    %v2369 = vpop.f32.mrb[0].mxu0
    %v2370 = vpop.f32.mrb[0].mxu0
    %v2371 = vpop.f32.mrb[0].mxu0
    %2372 = vdwg.mxu0
    %v2373 = vld [vmem:[%s19] sm:$0x1]
    %v2375 = vlaneseq
    %v2376 = vshrl.u32 %v2375, 7
    %v2377 = vsub.s32 0, %v2376
    %v2378 = vrot.slane %v2373, %v2377
    %v2380 = vadd.f32 %v2368, %v2378
    %2381 = vst [vmem:[%s23] sm:$0xff] %v2380
    // Predicated region
    $region118: #{_lambda_.1} parent=1 // pred_check
      _
    $region119: #{_lambda_.1} parent=1 // pred_check_branch
      %2383 = sbr.rel (0) target = $region121
    $region120: #{_lambda_.1} parent=1 // pred_region
      _
    $region121: #{_lambda_.1} parent=1 // pred_fallthru
      _
    // Predicated region
    $region122: #{_lambda_.1} parent=1 // pred_check
      _
    $region123: #{_lambda_.1} parent=1 // pred_check_branch
      %2385 = sbr.rel (0) target = $region125
    $region124: #{_lambda_.1} parent=1 // pred_region
      _
    $region125: #{_lambda_.1} parent=1 // pred_fallthru
      _
    // Predicated region
    $region126: #{_lambda_.1} parent=1 // pred_check
      _
    $region127: #{_lambda_.1} parent=1 // pred_check_branch
      %2387 = sbr.rel (0) target = $region129
    $region128: #{_lambda_.1} parent=1 // pred_region
      _
    $region129: #{_lambda_.1} parent=1 // pred_fallthru
      _
    // Predicated region
    $region130: #{_lambda_.1} parent=1 // pred_check
      _
    $region131: #{_lambda_.1} parent=1 // pred_check_branch
      %2389 = sbr.rel (0) target = $region133
    $region132: #{_lambda_.1} parent=1 // pred_region
      _
    $region133: #{_lambda_.1} parent=1 // pred_fallthru
      _
    // Predicated region
    $region134: #{_lambda_.1} parent=1 // pred_check
      _
    $region135: #{_lambda_.1} parent=1 // pred_check_branch
      %2391 = sbr.rel (0) target = $region137
    $region136: #{_lambda_.1} parent=1 // pred_region
      _
    $region137: #{_lambda_.1} parent=1 // pred_fallthru
      _
    // Predicated region
    $region138: #{_lambda_.1} parent=1 // pred_check
      _
    $region139: #{_lambda_.1} parent=1 // pred_check_branch
      %2393 = sbr.rel (0) target = $region141
    $region140: #{_lambda_.1} parent=1 // pred_region
      _
    $region141: #{_lambda_.1} parent=1 // pred_fallthru
      _
    // Predicated region
    $region142: #{_lambda_.1} parent=1 // pred_check
      _
    $region143: #{_lambda_.1} parent=1 // pred_check_branch
      %2395 = sbr.rel (0) target = $region145
    $region144: #{_lambda_.1} parent=1 // pred_region
      _
    $region145: #{_lambda_.1} parent=1 // pred_fallthru
      _
    // Predicated region
    $region146: #{_lambda_.1} parent=1 // pred_check
      _
    $region147: #{_lambda_.1} parent=1 // pred_check_branch
      %2397 = sbr.rel (0) target = $region149
    $region148: #{_lambda_.1} parent=1 // pred_region
      _
    $region149: #{_lambda_.1} parent=1 // pred_fallthru
      _
    %2398 = vsyncpa [#allocation3], 1
    %2399 = vsyncpa [#allocation5], 1
    %2400 = vsyncpa [#allocation8], 1
    %2401 = vsyncpa [#allocation11], 1
    %2402 = vsyncpa [#allocation14], 1

</llo_original>
